<compile_context>
chip_gen: v7x
topology: tpu7x:2x2x1
jax: 0.10.0
libtpu: 0.0.40
codegen_flags: <defaults>
</compile_context>

<pallas_src>
import jax
import jax.numpy as jnp
from jax.experimental import pallas as pl
from jax.experimental.pallas import tpu as pltpu

MATMUL_DTYPE = jnp.bfloat16            # MXU operand dtype; all accumulation is f32
EMB_VMEM_MAX_BYTES = 2 * 1024 * 1024   # embedding table kept VMEM-resident below this
MAX_OUT_TILE = 1024                    # lanes per output-projection tile


def _round_up(x, m):
    return ((x + m - 1) // m) * m


def _full_spec(shape):
    """Whole-array VMEM block with a constant index map (resident across the grid)."""
    n = len(shape)
    if n == 1:
        return pl.BlockSpec(shape, lambda j: (0,))
    if n == 2:
        return pl.BlockSpec(shape, lambda j: (0, 0))
    return pl.BlockSpec(shape, lambda j: (0, 0, 0))


def _make_decoder_kernel(L, B_pad, B_real, S, H, E, md, emb_in_vmem):
    """Fused decoder-step kernel for a fixed (static) padded configuration.

    Grid axis 0 tiles the output projection's N (vocab) dimension.  The attention +
    LSTM state update runs once (j == 0) and stages [h | weighted | embedded] in a
    VMEM scratch that every output tile reuses.
    """
    n_in = 12 + 2 * L

    def kernel(*refs):
        (ids_ref, hidden_ref, cell_ref, enc_ref, mask_ref, emb_ref,
         w_attn_h_ref, w_attn_e_ref, b_attn_ref, v_attn_ref) = refs[:10]
        lstm_refs = refs[10:10 + 2 * L]
        w_fc_ref, b_fc_ref = refs[10 + 2 * L:n_in]
        pred_ref, hid_out_ref, cell_out_ref, a_ref = refs[n_in:n_in + 4]
        if emb_in_vmem:
            (fc_in_ref,) = refs[n_in + 4:]
        else:
            fc_in_ref, emb_vmem, emb_sem = refs[n_in + 4:]

        @pl.when(pl.program_id(0) == 0)
        def _state_update():
            # ---- embedding gather (only the B real rows) ---------------------------
            # TODO(synk): training-mode dropout (p=0.5) not implemented; eval identity.
            if not emb_in_vmem:
                def emb_copy(b):
                    return pltpu.make_async_copy(
                        emb_ref.at[pl.ds(ids_ref[b], 1), :],
                        emb_vmem.at[pl.ds(b, 1), :],
                        emb_sem.at[b])
                for b in range(B_real):          # overlapped with the attention below
                    emb_copy(b).start()
                if B_pad > B_real:
                    emb_vmem[pl.ds(B_real, B_pad - B_real), :] = jnp.zeros(
                        (B_pad - B_real, E), jnp.float32)

            # ---- Bahdanau attention (split weights, bf16 MXU operands) -------------
            enc = enc_ref[...]                                       # (B,S,H) bf16
            h_top = hidden_ref[L - 1]                                # (B,H)   f32
            hn = (jnp.dot(h_top.astype(md), w_attn_h_ref[...],
                          preferred_element_type=jnp.float32)
                  + b_attn_ref[...])                                 # (B,H)
            en = jnp.dot(enc.reshape(B_pad * S, H), w_attn_e_ref[...],
                         preferred_element_type=jnp.float32)         # (B*S,H)
            energy = jnp.tanh(en.reshape(B_pad, S, H) + hn[:, None, :])
            scores = jnp.sum(energy * v_attn_ref[...], axis=-1)      # (B,S)
            scores = jnp.where(mask_ref[...] == 0.0, -1e10, scores)
            scores = scores - jnp.max(scores, axis=1, keepdims=True)
            ex = jnp.exp(scores)
            a = ex / jnp.sum(ex, axis=1, keepdims=True)   # exact: `a` is user-visible
            a_ref[...] = a        # store now: overlaps the gather, frees vregs early

            # ---- weighted context ---------------------------------------------------
            if S <= 32:           # VPU multiply + sublane reduce (MXU stays free)
                weighted = jnp.sum(a[:, :, None] * enc, axis=1)       # (B,H) f32
            else:                 # bf16 MXU bmm for longer sources
                weighted = jnp.einsum(
                    "bqs,bsh->bqh", a[:, None, :].astype(md), enc,
                    preferred_element_type=jnp.float32).reshape(B_pad, H)

            # ---- embedded rows ------------------------------------------------------
            if emb_in_vmem:
                rows = [emb_ref[pl.ds(ids_ref[b], 1), :] for b in range(B_real)]
                if B_pad > B_real:
                    rows.append(jnp.zeros((B_pad - B_real, E), jnp.float32))
                embedded = jnp.concatenate(rows, axis=0)              # (B,E) f32
            else:
                for b in range(B_real):
                    emb_copy(b).wait()
                embedded = emb_vmem[...]

            # ---- L-layer LSTM, one fused (B,K+H)x(K+H,4H) matmul per layer ----------
            x = jnp.concatenate([embedded, weighted], axis=-1)        # (B,E+H) f32
            for l in range(L):
                w_ref, bl_ref = lstm_refs[2 * l], lstm_refs[2 * l + 1]
                h_prev = hidden_ref[l]                                 # (B,H) f32
                c_prev = cell_ref[l]
                xh = jnp.concatenate([x, h_prev], axis=-1).astype(md)  # (B,K+H)
                gates = bl_ref[...] + jnp.dot(xh, w_ref[...],
                                              preferred_element_type=jnp.float32)
                sg = jax.nn.sigmoid(gates)      # full-width EUP sweeps, then lane-slice
                th = jnp.tanh(gates)
                i_g = sg[:, 0 * H:1 * H]
                f_g = sg[:, 1 * H:2 * H]
                g_g = th[:, 2 * H:3 * H]
                o_g = sg[:, 3 * H:4 * H]
                c_new = f_g * c_prev + i_g * g_g
                h_new = o_g * jnp.tanh(c_new)
                hid_out_ref[l] = h_new
                cell_out_ref[l] = c_new
                x = h_new            # inter-layer dropout = identity in eval mode

            # ---- stage the fc_out input, reused by every output tile ----------------
            fc_in_ref[...] = jnp.concatenate(
                [x, weighted, embedded], axis=-1).astype(md)           # (B,2H+E) bf16

        # ---- output projection: one fused (B,2H+E)x(2H+E,TN) matmul per OUT tile ----
        pred_ref[...] = (jnp.dot(fc_in_ref[...], w_fc_ref[...],
                                 preferred_element_type=jnp.float32)
                         + b_fc_ref[...])

    return kernel


@jax.jit
def decoder_forward(ids, hidden, cell, encoder_outputs, src_mask, params):
    """Wrapper: pads to (8,128)-friendly shapes, fuses/pre-casts weights, calls kernel."""
    md = MATMUL_DTYPE
    L, B, H = hidden.shape
    _, S, _ = encoder_outputs.shape
    vocab, E = params["embedding"].shape
    out_dim = params["b_fc"].shape[-1]

    B_pad = _round_up(B, 8)
    TN = min(_round_up(out_dim, 128), MAX_OUT_TILE)
    OUT_pad = _round_up(out_dim, TN)
    num_tiles = OUT_pad // TN
    pb = B_pad - B
    pn = OUT_pad - out_dim
    emb_in_vmem = (vocab * E * 4) <= EMB_VMEM_MAX_BYTES

    ids_p = jnp.pad(ids.astype(jnp.int32), (0, pb))
    hidden_p = jnp.pad(hidden, ((0, 0), (0, pb), (0, 0)))
    cell_p = jnp.pad(cell, ((0, 0), (0, pb), (0, 0)))
    enc_p = jnp.pad(encoder_outputs, ((0, pb), (0, 0), (0, 0))).astype(md)  # bf16
    mask_p = jnp.pad(src_mask, ((0, pb), (0, 0)), constant_values=1.0)

    # -- attention weight split: [h ; enc] @ W  ->  h @ W_h + enc @ W_e --------------
    w_attn = params["w_attn"]
    w_attn_h = w_attn[:H].astype(md)
    w_attn_e = w_attn[H:].astype(md)
    b_attn = params["b_attn"].astype(jnp.float32)
    v_attn = params["v_attn"].astype(jnp.float32)

    # -- LSTM: keep PyTorch (K,4H) gate layout, fuse [w_ih ; w_hh] along K -----------
    lstm_inputs, lstm_specs = [], []
    for l in range(L):
        w_cat = jnp.concatenate([params[f"w_ih_{l}"], params[f"w_hh_{l}"]],
                                axis=0).astype(md)                    # (K_l+H, 4H)
        b_l = params[f"b_lstm_{l}"].reshape(1, 4 * H).astype(jnp.float32)
        lstm_inputs += [w_cat, b_l]
        lstm_specs += [_full_spec(w_cat.shape), _full_spec((1, 4 * H))]

    # -- fc_out: single (2H+E, OUT_pad) weight, tiled along OUT ----------------------
    w_fc_p = jnp.pad(params["w_fc"], ((0, 0), (0, pn))).astype(md)
    b_fc_p = jnp.pad(params["b_fc"].reshape(1, -1),
                     ((0, 0), (0, pn))).astype(jnp.float32)
    emb = params["embedding"].astype(jnp.float32)

    inputs = [ids_p, hidden_p, cell_p, enc_p, mask_p, emb,
              w_attn_h, w_attn_e, b_attn, v_attn,
              *lstm_inputs, w_fc_p, b_fc_p]

    in_specs = [
        pl.BlockSpec(memory_space=pltpu.MemorySpace.SMEM),            # ids
        _full_spec((L, B_pad, H)),                                    # hidden
        _full_spec((L, B_pad, H)),                                    # cell
        _full_spec((B_pad, S, H)),                                    # encoder outputs
        _full_spec((B_pad, S)),                                       # mask
        (_full_spec((vocab, E)) if emb_in_vmem
         else pl.BlockSpec(memory_space=pl.ANY)),                     # embedding table
        _full_spec((H, H)), _full_spec((H, H)),                       # attn W blocks
        _full_spec((1, H)), _full_spec((1, H)),                       # b_attn, v_attn
        *lstm_specs,
        pl.BlockSpec((2 * H + E, TN), lambda j: (0, j)),              # fc weight tile
        pl.BlockSpec((1, TN), lambda j: (0, j)),                      # fc bias tile
    ]

    out_shape = (jax.ShapeDtypeStruct((B_pad, OUT_pad), jnp.float32),   # prediction
                 jax.ShapeDtypeStruct((L, B_pad, H), jnp.float32),      # new hidden
                 jax.ShapeDtypeStruct((L, B_pad, H), jnp.float32),      # new cell
                 jax.ShapeDtypeStruct((B_pad, S), jnp.float32))         # attention a
    out_specs = (pl.BlockSpec((B_pad, TN), lambda j: (0, j)),
                 _full_spec((L, B_pad, H)),
                 _full_spec((L, B_pad, H)),
                 _full_spec((B_pad, S)))

    scratch_shapes = [pltpu.VMEM((B_pad, 2 * H + E), md)]              # staged fc input
    if not emb_in_vmem:
        scratch_shapes += [pltpu.VMEM((B_pad, E), jnp.float32),
                           pltpu.SemaphoreType.DMA((B_pad,))]

    kernel = _make_decoder_kernel(L, B_pad, B, S, H, E, md, emb_in_vmem)

    pred_p, hid_new, cell_new, a_p = pl.pallas_call(
        kernel,
        grid=(num_tiles,),
        out_shape=out_shape,
        in_specs=in_specs,
        out_specs=out_specs,
        scratch_shapes=scratch_shapes,
        input_output_aliases={1: 1, 2: 2},      # hidden->new hidden, cell->new cell
        compiler_params=pltpu.CompilerParams(
            dimension_semantics=("arbitrary",),
            vmem_limit_bytes=32 * 1024 * 1024),
    )(*inputs)

    return (pred_p[:B, :out_dim], hid_new[:, :B], cell_new[:, :B], a_p[:B])


def _reference(ids, hidden, cell, enc, mask, p):
    """Plain-JAX reference mirroring the PyTorch eval-mode forward."""
    L, B, H = hidden.shape
    embedded = p["embedding"][ids]                                    # (B, E)
    h_top = hidden[-1]
    S = enc.shape[1]
    concat = jnp.concatenate(
        [jnp.broadcast_to(h_top[:, None, :], (B, S, H)), enc], axis=-1)
    energy = jnp.tanh(concat.reshape(B * S, -1) @ p["w_attn"] + p["b_attn"])
    scores = jnp.sum(energy * p["v_attn"], axis=-1).reshape(B, S)
    scores = jnp.where(mask == 0.0, -1e10, scores)
    a = jax.nn.softmax(scores, axis=1)
    weighted = jnp.sum(a[:, :, None] * enc, axis=1)
    x = jnp.concatenate([embedded, weighted], axis=-1)
    new_h, new_c = [], []
    for l in range(L):
        gates = (x @ p[f"w_ih_{l}"] + hidden[l] @ p[f"w_hh_{l}"]
                 + p[f"b_lstm_{l}"])
        i_g = jax.nn.sigmoid(gates[:, 0:H])
        f_g = jax.nn.sigmoid(gates[:, H:2 * H])
        g_g = jnp.tanh(gates[:, 2 * H:3 * H])
        o_g = jax.nn.sigmoid(gates[:, 3 * H:4 * H])
        c = f_g * cell[l] + i_g * g_g
        h = o_g * jnp.tanh(c)
        new_h.append(h)
        new_c.append(c)
        x = h
    out_cat = jnp.concatenate([x, weighted, embedded], axis=-1)
    pred = out_cat @ p["w_fc"] + p["b_fc"]
    return pred, jnp.stack(new_h), jnp.stack(new_c), a


if __name__ == "__main__":
    # Small shapes consistent with the module.
    B, S = 2, 8            # batch, source sequence length
    E, H = 32, 32          # emb_dim, hid_dim
    L = 2                  # n_layers
    OUT = 64               # output_dim (== decoder vocab size)

    key = jax.random.PRNGKey(0)
    ks = list(jax.random.split(key, 24))

    def nrm(k, shape, scale=0.1):
        return scale * jax.random.normal(k, shape, dtype=jnp.float32)

    params = {
        "embedding": nrm(ks[0], (OUT, E), 1.0),          # pretrained embedding matrix
        "w_attn": nrm(ks[1], (2 * H, H)),                # attn Linear(2H -> H), transposed
        "b_attn": nrm(ks[2], (1, H)),
        "v_attn": nrm(ks[3], (1, H)),                    # v: Linear(H -> 1, no bias)
        "w_fc": nrm(ks[4], (2 * H + E, OUT)),            # fc_out, transposed
        "b_fc": nrm(ks[5], (1, OUT)),
    }
    for l in range(L):
        in_l = (H + E) if l == 0 else H
        params[f"w_ih_{l}"] = nrm(ks[6 + 3 * l], (in_l, 4 * H))   # weight_ih_l{l}.T
        params[f"w_hh_{l}"] = nrm(ks[7 + 3 * l], (H, 4 * H))      # weight_hh_l{l}.T
        params[f"b_lstm_{l}"] = nrm(ks[8 + 3 * l], (1, 4 * H))    # bias_ih + bias_hh

    ids = jax.random.randint(ks[12], (B,), 0, OUT, dtype=jnp.int32)
    hidden = nrm(ks[13], (L, B, H), 1.0)
    cell = nrm(ks[14], (L, B, H), 1.0)
    encoder_outputs = nrm(ks[15], (B, S, H), 1.0)
    # pad out the last 2 positions of batch element 1
    src_mask = jnp.ones((B, S), dtype=jnp.float32).at[1, S - 2:].set(0.0)

    pred, hid_new, cell_new, attn = decoder_forward(
        ids, hidden, cell, encoder_outputs, src_mask, params)
    jax.block_until_ready((pred, hid_new, cell_new, attn))

    # Sanity check against a plain-JAX reference (loose tol for bf16 MXU operands).
    r_pred, r_hid, r_cell, r_attn = _reference(
        ids, hidden, cell, encoder_outputs, src_mask, params)
    assert jnp.allclose(pred, r_pred, rtol=5e-2, atol=5e-2)
    assert jnp.allclose(hid_new, r_hid, rtol=5e-2, atol=5e-2)
    assert jnp.allclose(cell_new, r_cell, rtol=5e-2, atol=5e-2)
    assert jnp.allclose(attn, r_attn, rtol=5e-2, atol=5e-2)
    assert jnp.all(jnp.isfinite(pred))

    print("KERNEL_OK")
</pallas_src>

<mosaic_0001>
module attributes {stable_mosaic.version = 11 : i64} {
  func.func @kernel(%arg0: i32, %arg1: memref<8xi32, #tpu.memory_space<smem>>, %arg2: memref<2x8x32xf32, #tpu.memory_space<vmem>>, %arg3: memref<2x8x32xf32, #tpu.memory_space<vmem>>, %arg4: memref<8x8x32xbf16, #tpu.memory_space<vmem>>, %arg5: memref<8x8xf32, #tpu.memory_space<vmem>>, %arg6: memref<64x32xf32, #tpu.memory_space<vmem>>, %arg7: memref<32x32xbf16, #tpu.memory_space<vmem>>, %arg8: memref<32x32xbf16, #tpu.memory_space<vmem>>, %arg9: memref<1x32xf32, #tpu.memory_space<vmem>>, %arg10: memref<1x32xf32, #tpu.memory_space<vmem>>, %arg11: memref<96x128xbf16, #tpu.memory_space<vmem>>, %arg12: memref<1x128xf32, #tpu.memory_space<vmem>>, %arg13: memref<64x128xbf16, #tpu.memory_space<vmem>>, %arg14: memref<1x128xf32, #tpu.memory_space<vmem>>, %arg15: memref<96x128xbf16, #tpu.memory_space<vmem>>, %arg16: memref<1x128xf32, #tpu.memory_space<vmem>>, %arg17: memref<8x128xf32, #tpu.memory_space<vmem>>, %arg18: memref<2x8x32xf32, #tpu.memory_space<vmem>>, %arg19: memref<2x8x32xf32, #tpu.memory_space<vmem>>, %arg20: memref<8x8xf32, #tpu.memory_space<vmem>>, %arg21: memref<8x96xbf16, #tpu.memory_space<vmem>>) attributes {dimension_semantics = [#tpu.dimension_semantics<arbitrary>], iteration_bounds = array<i64: 1>, scalar_prefetch = 0 : i64, scratch_operands = 1 : i64, tpu.core_type = #tpu.core_type<tc>, window_params = [{transform_indices = @transform_0, window_bounds = array<i64: 8>}, {pipeline_mode = #tpu.pipeline_mode<synchronous>, transform_indices = @transform_1, window_bounds = array<i64: 2, 8, 32>}, {pipeline_mode = #tpu.pipeline_mode<synchronous>, transform_indices = @transform_2, window_bounds = array<i64: 2, 8, 32>}, {pipeline_mode = #tpu.pipeline_mode<synchronous>, transform_indices = @transform_3, window_bounds = array<i64: 8, 8, 32>}, {pipeline_mode = #tpu.pipeline_mode<synchronous>, transform_indices = @transform_4, window_bounds = array<i64: 8, 8>}, {pipeline_mode = #tpu.pipeline_mode<synchronous>, transform_indices = @transform_5, window_bounds = array<i64: 64, 32>}, {pipeline_mode = #tpu.pipeline_mode<synchronous>, transform_indices = @transform_6, window_bounds = array<i64: 32, 32>}, {pipeline_mode = #tpu.pipeline_mode<synchronous>, transform_indices = @transform_7, window_bounds = array<i64: 32, 32>}, {pipeline_mode = #tpu.pipeline_mode<synchronous>, transform_indices = @transform_8, window_bounds = array<i64: 1, 32>}, {pipeline_mode = #tpu.pipeline_mode<synchronous>, transform_indices = @transform_9, window_bounds = array<i64: 1, 32>}, {pipeline_mode = #tpu.pipeline_mode<synchronous>, transform_indices = @transform_10, window_bounds = array<i64: 96, 128>}, {pipeline_mode = #tpu.pipeline_mode<synchronous>, transform_indices = @transform_11, window_bounds = array<i64: 1, 128>}, {pipeline_mode = #tpu.pipeline_mode<synchronous>, transform_indices = @transform_12, window_bounds = array<i64: 64, 128>}, {pipeline_mode = #tpu.pipeline_mode<synchronous>, transform_indices = @transform_13, window_bounds = array<i64: 1, 128>}, {transform_indices = @transform_14, window_bounds = array<i64: 96, 128>}, {transform_indices = @transform_15, window_bounds = array<i64: 1, 128>}, {transform_indices = @transform_16, window_bounds = array<i64: 8, 128>}, {pipeline_mode = #tpu.pipeline_mode<synchronous>, transform_indices = @transform_17, window_bounds = array<i64: 2, 8, 32>}, {pipeline_mode = #tpu.pipeline_mode<synchronous>, transform_indices = @transform_18, window_bounds = array<i64: 2, 8, 32>}, {pipeline_mode = #tpu.pipeline_mode<synchronous>, transform_indices = @transform_19, window_bounds = array<i64: 8, 8>}]} {
    %c0_i32 = arith.constant 0 : i32
    %0 = arith.cmpi eq, %arg0, %c0_i32 : i32
    %1 = arith.extui %0 : i1 to i32
    %c0_i32_0 = arith.constant 0 : i32
    %2 = arith.cmpi ne, %1, %c0_i32_0 : i32
    scf.if %2 {
      %c0_8 = arith.constant 0 : index
      %c0_9 = arith.constant 0 : index
      %c0_10 = arith.constant 0 : index
      %10 = vector.load %arg4[%c0_8, %c0_9, %c0_10] : memref<8x8x32xbf16, #tpu.memory_space<vmem>>, vector<8x8x32xbf16>
      %c1 = arith.constant 1 : index
      %c0_11 = arith.constant 0 : index
      %c0_12 = arith.constant 0 : index
      %11 = vector.load %arg2[%c1, %c0_11, %c0_12] : memref<2x8x32xf32, #tpu.memory_space<vmem>>, vector<1x8x32xf32>
      %12 = vector.shape_cast %11 : vector<1x8x32xf32> to vector<8x32xf32>
      %13 = arith.truncf %12 : vector<8x32xf32> to vector<8x32xbf16>
      %c0_13 = arith.constant 0 : index
      %c0_14 = arith.constant 0 : index
      %14 = vector.load %arg7[%c0_13, %c0_14] : memref<32x32xbf16, #tpu.memory_space<vmem>>, vector<32x32xbf16>
      %cst_15 = arith.constant dense<0.000000e+00> : vector<8x32xf32>
      %15 = tpu.matmul %13, %14, %cst_15 {dimension_numbers = #tpu.dot_dimension_numbers<[1], [0], [0], [1], [0, 0, 1, 1], [], []>} : vector<8x32xbf16>, vector<32x32xbf16>, vector<8x32xf32> -> vector<8x32xf32>
      %c0_16 = arith.constant 0 : index
      %c0_17 = arith.constant 0 : index
      %16 = vector.load %arg9[%c0_16, %c0_17] : memref<1x32xf32, #tpu.memory_space<vmem>>, vector<1x32xf32>
      %17 = vector.broadcast %16 : vector<1x32xf32> to vector<8x32xf32>
      %18 = arith.addf %15, %17 : vector<8x32xf32>
      %19 = vector.shape_cast %10 : vector<8x8x32xbf16> to vector<64x32xbf16>
      %c0_18 = arith.constant 0 : index
      %c0_19 = arith.constant 0 : index
      %20 = vector.load %arg8[%c0_18, %c0_19] : memref<32x32xbf16, #tpu.memory_space<vmem>>, vector<32x32xbf16>
      %cst_20 = arith.constant dense<0.000000e+00> : vector<64x32xf32>
      %21 = tpu.matmul %19, %20, %cst_20 {dimension_numbers = #tpu.dot_dimension_numbers<[1], [0], [0], [1], [0, 0, 1, 1], [], []>} : vector<64x32xbf16>, vector<32x32xbf16>, vector<64x32xf32> -> vector<64x32xf32>
      %22 = vector.shape_cast %21 : vector<64x32xf32> to vector<8x8x32xf32>
      %23 = vector.shape_cast %18 : vector<8x32xf32> to vector<8x1x32xf32>
      %24 = vector.broadcast %23 : vector<8x1x32xf32> to vector<8x8x32xf32>
      %25 = arith.addf %22, %24 : vector<8x8x32xf32>
      %26 = math.tanh %25 : vector<8x8x32xf32>
      %c0_21 = arith.constant 0 : index
      %c0_22 = arith.constant 0 : index
      %27 = vector.load %arg10[%c0_21, %c0_22] : memref<1x32xf32, #tpu.memory_space<vmem>>, vector<1x32xf32>
      %28 = vector.shape_cast %27 : vector<1x32xf32> to vector<1x1x32xf32>
      %29 = vector.broadcast %28 : vector<1x1x32xf32> to vector<8x8x32xf32>
      %30 = arith.mulf %26, %29 : vector<8x8x32xf32>
      %cst_23 = arith.constant dense<0.000000e+00> : vector<8x8xf32>
      %31 = vector.multi_reduction <add>, %30, %cst_23 [2] : vector<8x8x32xf32> to vector<8x8xf32>
      %c0_24 = arith.constant 0 : index
      %c0_25 = arith.constant 0 : index
      %32 = vector.load %arg5[%c0_24, %c0_25] : memref<8x8xf32, #tpu.memory_space<vmem>>, vector<8x8xf32>
      %cst_26 = arith.constant 0.000000e+00 : f32
      %33 = vector.broadcast %cst_26 : f32 to vector<8x8xf32>
      %34 = arith.cmpf oeq, %32, %33 : vector<8x8xf32>
      %cst_27 = arith.constant -1.000000e+10 : f32
      %35 = vector.broadcast %cst_27 : f32 to vector<8x8xf32>
      %36 = arith.select %34, %35, %31 : vector<8x8xi1>, vector<8x8xf32>
      %cst_28 = arith.constant dense<0xFF800000> : vector<8xf32>
      %37 = vector.multi_reduction <maximumf>, %36, %cst_28 [1] : vector<8x8xf32> to vector<8xf32>
      %38 = vector.shape_cast %37 : vector<8xf32> to vector<8x1xf32>
      %39 = vector.broadcast %38 : vector<8x1xf32> to vector<8x8xf32>
      %40 = arith.subf %36, %39 : vector<8x8xf32>
      %41 = math.exp %40 : vector<8x8xf32>
      %cst_29 = arith.constant dense<0.000000e+00> : vector<8xf32>
      %42 = vector.multi_reduction <add>, %41, %cst_29 [1] : vector<8x8xf32> to vector<8xf32>
      %43 = vector.shape_cast %42 : vector<8xf32> to vector<8x1xf32>
      %44 = vector.broadcast %43 : vector<8x1xf32> to vector<8x8xf32>
      %45 = arith.divf %41, %44 : vector<8x8xf32>
      %c0_30 = arith.constant 0 : index
      %c0_31 = arith.constant 0 : index
      %46 = vector.load %arg20[%c0_30, %c0_31] : memref<8x8xf32, #tpu.memory_space<vmem>>, vector<8x8xf32>
      tpu.vector_store %arg20[%c0_30, %c0_31], %45 {strides = array<i32>} : memref<8x8xf32, #tpu.memory_space<vmem>>, vector<8x8xf32>,
      %47 = vector.shape_cast %45 : vector<8x8xf32> to vector<8x8x1xf32>
      %48 = arith.extf %10 : vector<8x8x32xbf16> to vector<8x8x32xf32>
      %49 = vector.broadcast %47 : vector<8x8x1xf32> to vector<8x8x32xf32>
      %50 = arith.mulf %49, %48 : vector<8x8x32xf32>
      %cst_32 = arith.constant dense<0.000000e+00> : vector<8x32xf32>
      %51 = vector.multi_reduction <add>, %50, %cst_32 [1] : vector<8x8x32xf32> to vector<8x32xf32>
      %c0_33 = arith.constant 0 : index
      %52 = memref.load %arg1[%c0_33] : memref<8xi32, #tpu.memory_space<smem>>
      %53 = arith.index_cast %52 : i32 to index
      %c0_34 = arith.constant 0 : index
      %54 = vector.load %arg6[%53, %c0_34] : memref<64x32xf32, #tpu.memory_space<vmem>>, vector<1x32xf32>
      %c1_35 = arith.constant 1 : index
      %55 = memref.load %arg1[%c1_35] : memref<8xi32, #tpu.memory_space<smem>>
      %56 = arith.index_cast %55 : i32 to index
      %c0_36 = arith.constant 0 : index
      %57 = vector.load %arg6[%56, %c0_36] : memref<64x32xf32, #tpu.memory_space<vmem>>, vector<1x32xf32>
      %cst_37 = arith.constant 0.000000e+00 : f32
      %58 = vector.broadcast %cst_37 : f32 to vector<6x32xf32>
      %59 = tpu.concatenate %54, %57, %58 in 0 : vector<1x32xf32>, vector<1x32xf32>, vector<6x32xf32> -> vector<8x32xf32>
      %60 = tpu.concatenate %59, %51 in 1 : vector<8x32xf32>, vector<8x32xf32> -> vector<8x64xf32>
      %c0_38 = arith.constant 0 : index
      %c0_39 = arith.constant 0 : index
      %c0_40 = arith.constant 0 : index
      %61 = vector.load %arg2[%c0_38, %c0_39, %c0_40] : memref<2x8x32xf32, #tpu.memory_space<vmem>>, vector<1x8x32xf32>
      %62 = vector.shape_cast %61 : vector<1x8x32xf32> to vector<8x32xf32>
      %c0_41 = arith.constant 0 : index
      %c0_42 = arith.constant 0 : index
      %c0_43 = arith.constant 0 : index
      %63 = vector.load %arg3[%c0_41, %c0_42, %c0_43] : memref<2x8x32xf32, #tpu.memory_space<vmem>>, vector<1x8x32xf32>
      %64 = vector.shape_cast %63 : vector<1x8x32xf32> to vector<8x32xf32>
      %65 = tpu.concatenate %60, %62 in 1 : vector<8x64xf32>, vector<8x32xf32> -> vector<8x96xf32>
      %66 = arith.truncf %65 : vector<8x96xf32> to vector<8x96xbf16>
      %c0_44 = arith.constant 0 : index
      %c0_45 = arith.constant 0 : index
      %67 = vector.load %arg12[%c0_44, %c0_45] : memref<1x128xf32, #tpu.memory_space<vmem>>, vector<1x128xf32>
      %c0_46 = arith.constant 0 : index
      %c0_47 = arith.constant 0 : index
      %68 = vector.load %arg11[%c0_46, %c0_47] : memref<96x128xbf16, #tpu.memory_space<vmem>>, vector<96x128xbf16>
      %cst_48 = arith.constant dense<0.000000e+00> : vector<8x128xf32>
      %69 = tpu.matmul %66, %68, %cst_48 {dimension_numbers = #tpu.dot_dimension_numbers<[1], [0], [0], [1], [0, 0, 1, 1], [], []>} : vector<8x96xbf16>, vector<96x128xbf16>, vector<8x128xf32> -> vector<8x128xf32>
      %70 = vector.broadcast %67 : vector<1x128xf32> to vector<8x128xf32>
      %71 = arith.addf %70, %69 : vector<8x128xf32>
      %72 = arith.negf %71 : vector<8x128xf32>
      %73 = math.exp %72 : vector<8x128xf32>
      %cst_49 = arith.constant 1.000000e+00 : f32
      %74 = vector.broadcast %cst_49 : f32 to vector<8x128xf32>
      %75 = arith.addf %74, %73 : vector<8x128xf32>
      %76 = arith.divf %74, %75 : vector<8x128xf32>
      %77 = math.tanh %71 : vector<8x128xf32>
      %78 = vector.extract_strided_slice %76 {offsets = [0, 0], sizes = [8, 32], strides = [1, 1]} : vector<8x128xf32> to vector<8x32xf32>
      %79 = vector.extract_strided_slice %76 {offsets = [0, 32], sizes = [8, 32], strides = [1, 1]} : vector<8x128xf32> to vector<8x32xf32>
      %80 = vector.extract_strided_slice %77 {offsets = [0, 64], sizes = [8, 32], strides = [1, 1]} : vector<8x128xf32> to vector<8x32xf32>
      %81 = vector.extract_strided_slice %76 {offsets = [0, 96], sizes = [8, 32], strides = [1, 1]} : vector<8x128xf32> to vector<8x32xf32>
      %82 = arith.mulf %79, %64 : vector<8x32xf32>
      %83 = arith.mulf %78, %80 : vector<8x32xf32>
      %84 = arith.addf %82, %83 : vector<8x32xf32>
      %85 = math.tanh %84 : vector<8x32xf32>
      %86 = arith.mulf %81, %85 : vector<8x32xf32>
      %c0_50 = arith.constant 0 : index
      %c0_51 = arith.constant 0 : index
      %c0_52 = arith.constant 0 : index
      %87 = vector.load %arg18[%c0_50, %c0_51, %c0_52] : memref<2x8x32xf32, #tpu.memory_space<vmem>>, vector<1x8x32xf32>
      %88 = vector.shape_cast %87 : vector<1x8x32xf32> to vector<8x32xf32>
      %89 = vector.shape_cast %86 : vector<8x32xf32> to vector<1x8x32xf32>
      tpu.vector_store %arg18[%c0_50, %c0_51, %c0_52], %89 {strides = array<i32>} : memref<2x8x32xf32, #tpu.memory_space<vmem>>, vector<1x8x32xf32>,
      %c0_53 = arith.constant 0 : index
      %c0_54 = arith.constant 0 : index
      %c0_55 = arith.constant 0 : index
      %90 = vector.load %arg19[%c0_53, %c0_54, %c0_55] : memref<2x8x32xf32, #tpu.memory_space<vmem>>, vector<1x8x32xf32>
      %91 = vector.shape_cast %90 : vector<1x8x32xf32> to vector<8x32xf32>
      %92 = vector.shape_cast %84 : vector<8x32xf32> to vector<1x8x32xf32>
      tpu.vector_store %arg19[%c0_53, %c0_54, %c0_55], %92 {strides = array<i32>} : memref<2x8x32xf32, #tpu.memory_space<vmem>>, vector<1x8x32xf32>,
      %c1_56 = arith.constant 1 : index
      %c0_57 = arith.constant 0 : index
      %c0_58 = arith.constant 0 : index
      %93 = vector.load %arg2[%c1_56, %c0_57, %c0_58] : memref<2x8x32xf32, #tpu.memory_space<vmem>>, vector<1x8x32xf32>
      %94 = vector.shape_cast %93 : vector<1x8x32xf32> to vector<8x32xf32>
      %c1_59 = arith.constant 1 : index
      %c0_60 = arith.constant 0 : index
      %c0_61 = arith.constant 0 : index
      %95 = vector.load %arg3[%c1_59, %c0_60, %c0_61] : memref<2x8x32xf32, #tpu.memory_space<vmem>>, vector<1x8x32xf32>
      %96 = vector.shape_cast %95 : vector<1x8x32xf32> to vector<8x32xf32>
      %97 = tpu.concatenate %86, %94 in 1 : vector<8x32xf32>, vector<8x32xf32> -> vector<8x64xf32>
      %98 = arith.truncf %97 : vector<8x64xf32> to vector<8x64xbf16>
      %c0_62 = arith.constant 0 : index
      %c0_63 = arith.constant 0 : index
      %99 = vector.load %arg14[%c0_62, %c0_63] : memref<1x128xf32, #tpu.memory_space<vmem>>, vector<1x128xf32>
      %c0_64 = arith.constant 0 : index
      %c0_65 = arith.constant 0 : index
      %100 = vector.load %arg13[%c0_64, %c0_65] : memref<64x128xbf16, #tpu.memory_space<vmem>>, vector<64x128xbf16>
      %cst_66 = arith.constant dense<0.000000e+00> : vector<8x128xf32>
      %101 = tpu.matmul %98, %100, %cst_66 {dimension_numbers = #tpu.dot_dimension_numbers<[1], [0], [0], [1], [0, 0, 1, 1], [], []>} : vector<8x64xbf16>, vector<64x128xbf16>, vector<8x128xf32> -> vector<8x128xf32>
      %102 = vector.broadcast %99 : vector<1x128xf32> to vector<8x128xf32>
      %103 = arith.addf %102, %101 : vector<8x128xf32>
      %104 = arith.negf %103 : vector<8x128xf32>
      %105 = math.exp %104 : vector<8x128xf32>
      %cst_67 = arith.constant 1.000000e+00 : f32
      %106 = vector.broadcast %cst_67 : f32 to vector<8x128xf32>
      %107 = arith.addf %106, %105 : vector<8x128xf32>
      %108 = arith.divf %106, %107 : vector<8x128xf32>
      %109 = math.tanh %103 : vector<8x128xf32>
      %110 = vector.extract_strided_slice %108 {offsets = [0, 0], sizes = [8, 32], strides = [1, 1]} : vector<8x128xf32> to vector<8x32xf32>
      %111 = vector.extract_strided_slice %108 {offsets = [0, 32], sizes = [8, 32], strides = [1, 1]} : vector<8x128xf32> to vector<8x32xf32>
      %112 = vector.extract_strided_slice %109 {offsets = [0, 64], sizes = [8, 32], strides = [1, 1]} : vector<8x128xf32> to vector<8x32xf32>
      %113 = vector.extract_strided_slice %108 {offsets = [0, 96], sizes = [8, 32], strides = [1, 1]} : vector<8x128xf32> to vector<8x32xf32>
      %114 = arith.mulf %111, %96 : vector<8x32xf32>
      %115 = arith.mulf %110, %112 : vector<8x32xf32>
      %116 = arith.addf %114, %115 : vector<8x32xf32>
      %117 = math.tanh %116 : vector<8x32xf32>
      %118 = arith.mulf %113, %117 : vector<8x32xf32>
      %c1_68 = arith.constant 1 : index
      %c0_69 = arith.constant 0 : index
      %c0_70 = arith.constant 0 : index
      %119 = vector.load %arg18[%c1_68, %c0_69, %c0_70] : memref<2x8x32xf32, #tpu.memory_space<vmem>>, vector<1x8x32xf32>
      %120 = vector.shape_cast %119 : vector<1x8x32xf32> to vector<8x32xf32>
      %121 = vector.shape_cast %118 : vector<8x32xf32> to vector<1x8x32xf32>
      tpu.vector_store %arg18[%c1_68, %c0_69, %c0_70], %121 {strides = array<i32>} : memref<2x8x32xf32, #tpu.memory_space<vmem>>, vector<1x8x32xf32>,
      %c1_71 = arith.constant 1 : index
      %c0_72 = arith.constant 0 : index
      %c0_73 = arith.constant 0 : index
      %122 = vector.load %arg19[%c1_71, %c0_72, %c0_73] : memref<2x8x32xf32, #tpu.memory_space<vmem>>, vector<1x8x32xf32>
      %123 = vector.shape_cast %122 : vector<1x8x32xf32> to vector<8x32xf32>
      %124 = vector.shape_cast %116 : vector<8x32xf32> to vector<1x8x32xf32>
      tpu.vector_store %arg19[%c1_71, %c0_72, %c0_73], %124 {strides = array<i32>} : memref<2x8x32xf32, #tpu.memory_space<vmem>>, vector<1x8x32xf32>,
      %125 = tpu.concatenate %118, %51, %59 in 1 : vector<8x32xf32>, vector<8x32xf32>, vector<8x32xf32> -> vector<8x96xf32>
      %126 = arith.truncf %125 : vector<8x96xf32> to vector<8x96xbf16>
      %c0_74 = arith.constant 0 : index
      %c0_75 = arith.constant 0 : index
      %127 = vector.load %arg21[%c0_74, %c0_75] : memref<8x96xbf16, #tpu.memory_space<vmem>>, vector<8x96xbf16>
      tpu.vector_store %arg21[%c0_74, %c0_75], %126 {strides = array<i32>} : memref<8x96xbf16, #tpu.memory_space<vmem>>, vector<8x96xbf16>,
    } else {
    }
    %c0 = arith.constant 0 : index
    %c0_1 = arith.constant 0 : index
    %3 = vector.load %arg21[%c0, %c0_1] : memref<8x96xbf16, #tpu.memory_space<vmem>>, vector<8x96xbf16>
    %c0_2 = arith.constant 0 : index
    %c0_3 = arith.constant 0 : index
    %4 = vector.load %arg15[%c0_2, %c0_3] : memref<96x128xbf16, #tpu.memory_space<vmem>>, vector<96x128xbf16>
    %cst = arith.constant dense<0.000000e+00> : vector<8x128xf32>
    %5 = tpu.matmul %3, %4, %cst {dimension_numbers = #tpu.dot_dimension_numbers<[1], [0], [0], [1], [0, 0, 1, 1], [], []>} : vector<8x96xbf16>, vector<96x128xbf16>, vector<8x128xf32> -> vector<8x128xf32>
    %c0_4 = arith.constant 0 : index
    %c0_5 = arith.constant 0 : index
    %6 = vector.load %arg16[%c0_4, %c0_5] : memref<1x128xf32, #tpu.memory_space<vmem>>, vector<1x128xf32>
    %7 = vector.broadcast %6 : vector<1x128xf32> to vector<8x128xf32>
    %8 = arith.addf %5, %7 : vector<8x128xf32>
    %c0_6 = arith.constant 0 : index
    %c0_7 = arith.constant 0 : index
    %9 = vector.load %arg17[%c0_6, %c0_7] : memref<8x128xf32, #tpu.memory_space<vmem>>, vector<8x128xf32>
    tpu.vector_store %arg17[%c0_6, %c0_7], %8 {strides = array<i32>} : memref<8x128xf32, #tpu.memory_space<vmem>>, vector<8x128xf32>,
    return
  }
  func.func @transform_0(%arg0: i32) -> i32 {
    %c0_i32 = arith.constant 0 : i32
    %c0_i32_0 = arith.constant 0 : i32
    return %c0_i32 : i32
  }
  func.func @transform_1(%arg0: i32) -> (i32, i32, i32) {
    %c0_i32 = arith.constant 0 : i32
    %c0_i32_0 = arith.constant 0 : i32
    %c0_i32_1 = arith.constant 0 : i32
    %c0_i32_2 = arith.constant 0 : i32
    return %c0_i32, %c0_i32_0, %c0_i32_1 : i32, i32, i32
  }
  func.func @transform_2(%arg0: i32) -> (i32, i32, i32) {
    %c0_i32 = arith.constant 0 : i32
    %c0_i32_0 = arith.constant 0 : i32
    %c0_i32_1 = arith.constant 0 : i32
    %c0_i32_2 = arith.constant 0 : i32
    return %c0_i32, %c0_i32_0, %c0_i32_1 : i32, i32, i32
  }
  func.func @transform_3(%arg0: i32) -> (i32, i32, i32) {
    %c0_i32 = arith.constant 0 : i32
    %c0_i32_0 = arith.constant 0 : i32
    %c0_i32_1 = arith.constant 0 : i32
    %c0_i32_2 = arith.constant 0 : i32
    return %c0_i32, %c0_i32_0, %c0_i32_1 : i32, i32, i32
  }
  func.func @transform_4(%arg0: i32) -> (i32, i32) {
    %c0_i32 = arith.constant 0 : i32
    %c0_i32_0 = arith.constant 0 : i32
    %c0_i32_1 = arith.constant 0 : i32
    return %c0_i32, %c0_i32_0 : i32, i32
  }
  func.func @transform_5(%arg0: i32) -> (i32, i32) {
    %c0_i32 = arith.constant 0 : i32
    %c0_i32_0 = arith.constant 0 : i32
    %c0_i32_1 = arith.constant 0 : i32
    return %c0_i32, %c0_i32_0 : i32, i32
  }
  func.func @transform_6(%arg0: i32) -> (i32, i32) {
    %c0_i32 = arith.constant 0 : i32
    %c0_i32_0 = arith.constant 0 : i32
    %c0_i32_1 = arith.constant 0 : i32
    return %c0_i32, %c0_i32_0 : i32, i32
  }
  func.func @transform_7(%arg0: i32) -> (i32, i32) {
    %c0_i32 = arith.constant 0 : i32
    %c0_i32_0 = arith.constant 0 : i32
    %c0_i32_1 = arith.constant 0 : i32
    return %c0_i32, %c0_i32_0 : i32, i32
  }
  func.func @transform_8(%arg0: i32) -> (i32, i32) {
    %c0_i32 = arith.constant 0 : i32
    %c0_i32_0 = arith.constant 0 : i32
    %c0_i32_1 = arith.constant 0 : i32
    return %c0_i32, %c0_i32_0 : i32, i32
  }
  func.func @transform_9(%arg0: i32) -> (i32, i32) {
    %c0_i32 = arith.constant 0 : i32
    %c0_i32_0 = arith.constant 0 : i32
    %c0_i32_1 = arith.constant 0 : i32
    return %c0_i32, %c0_i32_0 : i32, i32
  }
  func.func @transform_10(%arg0: i32) -> (i32, i32) {
    %c0_i32 = arith.constant 0 : i32
    %c0_i32_0 = arith.constant 0 : i32
    %c0_i32_1 = arith.constant 0 : i32
    return %c0_i32, %c0_i32_0 : i32, i32
  }
  func.func @transform_11(%arg0: i32) -> (i32, i32) {
    %c0_i32 = arith.constant 0 : i32
    %c0_i32_0 = arith.constant 0 : i32
    %c0_i32_1 = arith.constant 0 : i32
    return %c0_i32, %c0_i32_0 : i32, i32
  }
  func.func @transform_12(%arg0: i32) -> (i32, i32) {
    %c0_i32 = arith.constant 0 : i32
    %c0_i32_0 = arith.constant 0 : i32
    %c0_i32_1 = arith.constant 0 : i32
    return %c0_i32, %c0_i32_0 : i32, i32
  }
  func.func @transform_13(%arg0: i32) -> (i32, i32) {
    %c0_i32 = arith.constant 0 : i32
    %c0_i32_0 = arith.constant 0 : i32
    %c0_i32_1 = arith.constant 0 : i32
    return %c0_i32, %c0_i32_0 : i32, i32
  }
  func.func @transform_14(%arg0: i32) -> (i32, i32) {
    %c0_i32 = arith.constant 0 : i32
    %c0_i32_0 = arith.constant 0 : i32
    return %c0_i32, %arg0 : i32, i32
  }
  func.func @transform_15(%arg0: i32) -> (i32, i32) {
    %c0_i32 = arith.constant 0 : i32
    %c0_i32_0 = arith.constant 0 : i32
    return %c0_i32, %arg0 : i32, i32
  }
  func.func @transform_16(%arg0: i32) -> (i32, i32) {
    %c0_i32 = arith.constant 0 : i32
    %c0_i32_0 = arith.constant 0 : i32
    return %c0_i32, %arg0 : i32, i32
  }
  func.func @transform_17(%arg0: i32) -> (i32, i32, i32) {
    %c0_i32 = arith.constant 0 : i32
    %c0_i32_0 = arith.constant 0 : i32
    %c0_i32_1 = arith.constant 0 : i32
    %c0_i32_2 = arith.constant 0 : i32
    return %c0_i32, %c0_i32_0, %c0_i32_1 : i32, i32, i32
  }
  func.func @transform_18(%arg0: i32) -> (i32, i32, i32) {
    %c0_i32 = arith.constant 0 : i32
    %c0_i32_0 = arith.constant 0 : i32
    %c0_i32_1 = arith.constant 0 : i32
    %c0_i32_2 = arith.constant 0 : i32
    return %c0_i32, %c0_i32_0, %c0_i32_1 : i32, i32, i32
  }
  func.func @transform_19(%arg0: i32) -> (i32, i32) {
    %c0_i32 = arith.constant 0 : i32
    %c0_i32_0 = arith.constant 0 : i32
    %c0_i32_1 = arith.constant 0 : i32
    return %c0_i32, %c0_i32_0 : i32, i32
  }
}

</mosaic_0001>

<llo_original>
// kernel: decoder_forward.1
$region0: #{decoder_forward.1}
  #allocation0 [shape = 'u32[]', space=smem, size = 0x4, offset = 0x4, fixed_abs, tag = 'smem constant byte address 0x4 - core index']
  #allocation1 [shape = 'u32[144,128]{1,0:T(1,128)}', space=vmem, size = 0x12000, scoped, tag = 'internal scratch']
  #allocation2 [shape = 'bf16[8,96]{1,0:T(8,128)(2,1)}', space=vmem, size = 0x800, scoped, tag = 'scratch operand']
  %s0 = inlined_call_operand.vmem [shape: s32[8], index: 0, kind: input, shape index: {}]
  %s1 = inlined_call_operand.vmem [shape: f32[2,8,32], index: 1, kind: input, shape index: {}, may-alias: {1,17}]
  %s2 = inlined_call_operand.vmem [shape: f32[2,8,32], index: 2, kind: input, shape index: {}, may-alias: {2,18}]
  %s3 = inlined_call_operand.vmem [shape: bf16[8,8,32], index: 3, kind: input, shape index: {}]
  %s4 = inlined_call_operand.vmem [shape: f32[8,8], index: 4, kind: input, shape index: {}]
  %s5 = inlined_call_operand.vmem [shape: f32[64,32], index: 5, kind: input, shape index: {}]
  %s6 = inlined_call_operand.vmem [shape: bf16[32,32], index: 6, kind: input, shape index: {}]
  %s7 = inlined_call_operand.vmem [shape: bf16[32,32], index: 7, kind: input, shape index: {}]
  %s8 = inlined_call_operand.vmem [shape: f32[1,32], index: 8, kind: input, shape index: {}]
  %s9 = inlined_call_operand.vmem [shape: f32[1,32], index: 9, kind: input, shape index: {}]
  %s10 = inlined_call_operand.vmem [shape: bf16[96,128], index: 10, kind: input, shape index: {}]
  %s11 = inlined_call_operand.vmem [shape: f32[1,128], index: 11, kind: input, shape index: {}]
  %s12 = inlined_call_operand.vmem [shape: bf16[64,128], index: 12, kind: input, shape index: {}]
  %s13 = inlined_call_operand.vmem [shape: f32[1,128], index: 13, kind: input, shape index: {}]
  %s14 = inlined_call_operand.vmem [shape: bf16[96,128], index: 14, kind: input, shape index: {}]
  %s15 = inlined_call_operand.vmem [shape: f32[1,128], index: 15, kind: input, shape index: {}]
  %s16 = inlined_call_operand.vmem [shape: f32[8,128], index: 16, kind: output, shape index: {0}]
  %s17 = inlined_call_operand.vmem [shape: f32[2,8,32], index: 17, kind: output, shape index: {1}, may-alias: {1,17}]
  %s18 = inlined_call_operand.vmem [shape: f32[2,8,32], index: 18, kind: output, shape index: {2}, may-alias: {2,18}]
  %s19 = inlined_call_operand.vmem [shape: f32[8,8], index: 19, kind: output, shape index: {3}]
  %20 = xla_tuple %s16, %s17, %s18, %s19
  %s21 = sld [smem:[#allocation0]]
  $region106: #{decoder_forward.1} parent=0
    _
  %s23 = ssub.s32 1, %s21
  %s24 = scalar_select 0, %s23, %s21
  $region1: #{decoder_forward.1} parent=0
    #allocation3 [shape = 'u8[512]{0}', space=smem, size = 0x200, scoped, tag = 'input window, operand 0, single buffered']
    #allocation4 [shape = 's32[1]{0}', space=sflag, size = 0x4, scoped, tag = 'scoped memory for decoder_forward.1']
    %25 = vsyncpa [#allocation4], 0
    // Predicated region
    $region2: #{decoder_forward.1} parent=1 // pred_check
      _
    $region3: #{decoder_forward.1} parent=1 // pred_check_branch
      %27 = sbr.rel (0) target = $region5
    $region4: #{decoder_forward.1} parent=1 // pred_region
      %s29 = ssub.s32 16, 16
      %30 = vsyncadd [#allocation4], %s29
      %s32 = sshll.u32 %s0, 4
      %s33 = int_to_ptr.vmem [resolvable:$true] %s32
      %35 = dma.vmem_to_smem %s33, 16, [#allocation3], [#allocation4]
    $region5: #{decoder_forward.1} parent=1 // pred_fallthru
      _
    // Predicated region
    $region6: #{decoder_forward.1} parent=1 // pred_check
      _
    $region7: #{decoder_forward.1} parent=1 // pred_check_branch
      %37 = sbr.rel (0) target = $region9
    $region8: #{decoder_forward.1} parent=1 // pred_region
      _
    $region9: #{decoder_forward.1} parent=1 // pred_fallthru
      _
    // Predicated region
    $region10: #{decoder_forward.1} parent=1 // pred_check
      _
    $region11: #{decoder_forward.1} parent=1 // pred_check_branch
      %39 = sbr.rel (0) target = $region13
    $region12: #{decoder_forward.1} parent=1 // pred_region
      _
    $region13: #{decoder_forward.1} parent=1 // pred_fallthru
      _
    // Predicated region
    $region14: #{decoder_forward.1} parent=1 // pred_check
      _
    $region15: #{decoder_forward.1} parent=1 // pred_check_branch
      %41 = sbr.rel (0) target = $region17
    $region16: #{decoder_forward.1} parent=1 // pred_region
      _
    $region17: #{decoder_forward.1} parent=1 // pred_fallthru
      _
    // Predicated region
    $region18: #{decoder_forward.1} parent=1 // pred_check
      _
    $region19: #{decoder_forward.1} parent=1 // pred_check_branch
      %43 = sbr.rel (0) target = $region21
    $region20: #{decoder_forward.1} parent=1 // pred_region
      _
    $region21: #{decoder_forward.1} parent=1 // pred_fallthru
      _
    // Predicated region
    $region22: #{decoder_forward.1} parent=1 // pred_check
      _
    $region23: #{decoder_forward.1} parent=1 // pred_check_branch
      %45 = sbr.rel (0) target = $region25
    $region24: #{decoder_forward.1} parent=1 // pred_region
      _
    $region25: #{decoder_forward.1} parent=1 // pred_fallthru
      _
    // Predicated region
    $region26: #{decoder_forward.1} parent=1 // pred_check
      _
    $region27: #{decoder_forward.1} parent=1 // pred_check_branch
      %47 = sbr.rel (0) target = $region29
    $region28: #{decoder_forward.1} parent=1 // pred_region
      _
    $region29: #{decoder_forward.1} parent=1 // pred_fallthru
      _
    // Predicated region
    $region30: #{decoder_forward.1} parent=1 // pred_check
      _
    $region31: #{decoder_forward.1} parent=1 // pred_check_branch
      %49 = sbr.rel (0) target = $region33
    $region32: #{decoder_forward.1} parent=1 // pred_region
      _
    $region33: #{decoder_forward.1} parent=1 // pred_fallthru
      _
    // Predicated region
    $region34: #{decoder_forward.1} parent=1 // pred_check
      _
    $region35: #{decoder_forward.1} parent=1 // pred_check_branch
      %51 = sbr.rel (0) target = $region37
    $region36: #{decoder_forward.1} parent=1 // pred_region
      _
    $region37: #{decoder_forward.1} parent=1 // pred_fallthru
      _
    // Predicated region
    $region38: #{decoder_forward.1} parent=1 // pred_check
      _
    $region39: #{decoder_forward.1} parent=1 // pred_check_branch
      %53 = sbr.rel (0) target = $region41
    $region40: #{decoder_forward.1} parent=1 // pred_region
      _
    $region41: #{decoder_forward.1} parent=1 // pred_fallthru
      _
    // Predicated region
    $region42: #{decoder_forward.1} parent=1 // pred_check
      _
    $region43: #{decoder_forward.1} parent=1 // pred_check_branch
      %55 = sbr.rel (0) target = $region45
    $region44: #{decoder_forward.1} parent=1 // pred_region
      _
    $region45: #{decoder_forward.1} parent=1 // pred_fallthru
      _
    // Predicated region
    $region46: #{decoder_forward.1} parent=1 // pred_check
      _
    $region47: #{decoder_forward.1} parent=1 // pred_check_branch
      %57 = sbr.rel (0) target = $region49
    $region48: #{decoder_forward.1} parent=1 // pred_region
      _
    $region49: #{decoder_forward.1} parent=1 // pred_fallthru
      _
    // Predicated region
    $region50: #{decoder_forward.1} parent=1 // pred_check
      _
    $region51: #{decoder_forward.1} parent=1 // pred_check_branch
      %59 = sbr.rel (0) target = $region53
    $region52: #{decoder_forward.1} parent=1 // pred_region
      _
    $region53: #{decoder_forward.1} parent=1 // pred_fallthru
      _
    // Predicated region
    $region54: #{decoder_forward.1} parent=1 // pred_check
      _
    $region55: #{decoder_forward.1} parent=1 // pred_check_branch
      %61 = sbr.rel (0) target = $region57
    $region56: #{decoder_forward.1} parent=1 // pred_region
      _
    $region57: #{decoder_forward.1} parent=1 // pred_fallthru
      _
    // Predicated region
    $region58: #{decoder_forward.1} parent=1 // pred_check
      _
    $region59: #{decoder_forward.1} parent=1 // pred_check_branch
      %63 = sbr.rel (0) target = $region61
    $region60: #{decoder_forward.1} parent=1 // pred_region
      _
    $region61: #{decoder_forward.1} parent=1 // pred_fallthru
      _
    // Predicated region
    $region62: #{decoder_forward.1} parent=1 // pred_check
      _
    $region63: #{decoder_forward.1} parent=1 // pred_check_branch
      %65 = sbr.rel (0) target = $region65
    $region64: #{decoder_forward.1} parent=1 // pred_region
      _
    $region65: #{decoder_forward.1} parent=1 // pred_fallthru
      _
    // Predicated region
    $region66: #{decoder_forward.1} parent=1 // pred_check
      _
    $region67: #{decoder_forward.1} parent=1 // pred_check_branch
      %67 = sbr.rel (0) target = $region69
    $region68: #{decoder_forward.1} parent=1 // pred_region
      %68 = dma.done [#allocation4], 16
    $region69: #{decoder_forward.1} parent=1 // pred_fallthru
      _
    %69 = sfence
    %p71 = scmp.eq.s32.totalorder 0, 0
    // Predicated region
    $region70: #{decoder_forward.1} parent=1 // pred_check
      %p72 = pneg %p71
    $region71: #{decoder_forward.1} parent=1 // pred_check_branch
      %74 = sbr.rel (%p72) target = $region73
    $region72: #{decoder_forward.1} parent=1 // pred_region
      %v75 = vld [vmem:[%s3] sm:$0xf]
      %v76 = vld [vmem:[%s3 + $0x4] sm:$0xf]
      %v77 = vld [vmem:[%s3 + $0x8] sm:$0xf]
      %v78 = vld [vmem:[%s3 + $0xc] sm:$0xf]
      %v79 = vld [vmem:[%s3 + $0x10] sm:$0xf]
      %v80 = vld [vmem:[%s3 + $0x14] sm:$0xf]
      %v81 = vld [vmem:[%s3 + $0x18] sm:$0xf]
      %v82 = vld [vmem:[%s3 + $0x1c] sm:$0xf]
      %s83 = scalar_lea.vmem %s1, 8
      %v84 = vld [vmem:[%s83] sm:$0xff]
      %v85 = vpack.c.bf16 %v84, %v84
      %v86 = vld [vmem:[%s6] sm:$0xf]
      %v87 = vld [vmem:[%s6 + $0x4] sm:$0xf]
      %v88 = vld [vmem:[%s6 + $0x8] sm:$0xf]
      %v89 = vld [vmem:[%s6 + $0xc] sm:$0xf]
      %v90 = vld [vmem:[%s8] sm:$0x1]
      %v92 = vlaneseq
      %v93 = vshrl.u32 %v92, 7
      %v94 = vsub.s32 0, %v93
      %v95 = vrot.slane %v90, %v94
      %v101 = vunpack.c.l.b16 %v86
      %v102 = vunpack.c.l.b16 %v87
      %v103 = vunpack.c.l.b16 %v88
      %v104 = vunpack.c.l.b16 %v89
      %v105 = vpack.c.b16 %v102, %v101
      %v106 = vpack.c.b16 %v104, %v103
      %vm109 = vcmask 261120
      %v111 = vsel %vm109, %v85, 0
      %113 = vmatprep.subr.bf16.mxu0 0
      %114 = vmatpush1.bf16.msra.mxu0 %v105
      %115 = vmatprep.subr.bf16.mxu0 0
      %116 = vmatpush1.bf16.msra.mxu0 %v106
      %117 = vmatprep.subr.bf16.mxu0 0
      %118 = vmatpush1.bf16.msra.mxu0 0
      %119 = vmatprep.subr.bf16.mxu0 0
      %120 = vmatpush1.bf16.msra.mxu0 0
      %121 = vmatprep.subr.bf16.mxu0 0
      %122 = vmatpush1.bf16.msra.mxu0 0
      %123 = vmatprep.subr.bf16.mxu0 0
      %124 = vmatpush1.bf16.msra.mxu0 0
      %125 = vmatprep.subr.bf16.mxu0 0
      %126 = vmatpush1.bf16.msra.mxu0 0
      %127 = vmatprep.subr.bf16.mxu0 0
      %128 = vmatpush1.bf16.msra.mxu0 0
      %129 = vmatprep.subr.bf16.mxu0 0
      %130 = vmatpush1.bf16.msra.mxu0 0
      %131 = vmatprep.subr.bf16.mxu0 0
      %132 = vmatpush1.bf16.msra.mxu0 0
      %133 = vmatprep.subr.bf16.mxu0 0
      %134 = vmatpush1.bf16.msra.mxu0 0
      %135 = vmatprep.subr.bf16.mxu0 0
      %136 = vmatpush1.bf16.msra.mxu0 0
      %137 = vmatprep.subr.bf16.mxu0 0
      %138 = vmatpush1.bf16.msra.mxu0 0
      %139 = vmatprep.subr.bf16.mxu0 0
      %140 = vmatpush1.bf16.msra.mxu0 0
      %141 = vmatprep.subr.bf16.mxu0 0
      %142 = vmatpush1.bf16.msra.mxu0 0
      %143 = vmatprep.subr.bf16.mxu0 0
      %144 = vmatpush1.bf16.msra.mxu0 0
      %145 = vmatprep.mubr.bf16.mxu0 0
      %146 = vmatmul.mubr.bf16.gmra.mrb[0].mxu0 %v111
      %v147 = vpop.f32.mrb[0].mxu0
      %v148 = vadd.f32 %v95, %v147
      %v149 = vpop.f32.mrb[0].mxu0
      %v150 = vpop.f32.mrb[0].mxu0
      %v151 = vpop.f32.mrb[0].mxu0
      %152 = vdwg.mxu0
      %v153 = vld [vmem:[%s7] sm:$0xf]
      %v154 = vld [vmem:[%s7 + $0x4] sm:$0xf]
      %v155 = vld [vmem:[%s7 + $0x8] sm:$0xf]
      %v156 = vld [vmem:[%s7 + $0xc] sm:$0xf]
      %v165 = vunpack.c.l.b16 %v75
      %v166 = vunpack.c.l.b16 %v76
      %v167 = vunpack.c.l.b16 %v77
      %v168 = vunpack.c.l.b16 %v78
      %v169 = vunpack.c.l.b16 %v79
      %v170 = vunpack.c.l.b16 %v80
      %v171 = vunpack.c.l.b16 %v81
      %v172 = vunpack.c.l.b16 %v82
      %v173 = vpack.c.b16 %v166, %v165
      %v174 = vpack.c.b16 %v168, %v167
      %v175 = vpack.c.b16 %v170, %v169
      %v176 = vpack.c.b16 %v172, %v171
      %v181 = vunpack.c.l.b16 %v153
      %v182 = vunpack.c.l.b16 %v154
      %v183 = vunpack.c.l.b16 %v155
      %v184 = vunpack.c.l.b16 %v156
      %v185 = vpack.c.b16 %v182, %v181
      %v186 = vpack.c.b16 %v184, %v183
      %v190 = vsel %vm109, %v173, 0
      %v193 = vsel %vm109, %v174, 0
      %v196 = vsel %vm109, %v175, 0
      %v199 = vsel %vm109, %v176, 0
      %201 = vmatprep.subr.bf16.mxu0 0
      %202 = vmatpush1.bf16.msra.mxu0 %v185
      %203 = vmatprep.subr.bf16.mxu0 0
      %204 = vmatpush1.bf16.msra.mxu0 %v186
      %205 = vmatprep.subr.bf16.mxu0 0
      %206 = vmatpush1.bf16.msra.mxu0 0
      %207 = vmatprep.subr.bf16.mxu0 0
      %208 = vmatpush1.bf16.msra.mxu0 0
      %209 = vmatprep.subr.bf16.mxu0 0
      %210 = vmatpush1.bf16.msra.mxu0 0
      %211 = vmatprep.subr.bf16.mxu0 0
      %212 = vmatpush1.bf16.msra.mxu0 0
      %213 = vmatprep.subr.bf16.mxu0 0
      %214 = vmatpush1.bf16.msra.mxu0 0
      %215 = vmatprep.subr.bf16.mxu0 0
      %216 = vmatpush1.bf16.msra.mxu0 0
      %217 = vmatprep.subr.bf16.mxu0 0
      %218 = vmatpush1.bf16.msra.mxu0 0
      %219 = vmatprep.subr.bf16.mxu0 0
      %220 = vmatpush1.bf16.msra.mxu0 0
      %221 = vmatprep.subr.bf16.mxu0 0
      %222 = vmatpush1.bf16.msra.mxu0 0
      %223 = vmatprep.subr.bf16.mxu0 0
      %224 = vmatpush1.bf16.msra.mxu0 0
      %225 = vmatprep.subr.bf16.mxu0 0
      %226 = vmatpush1.bf16.msra.mxu0 0
      %227 = vmatprep.subr.bf16.mxu0 0
      %228 = vmatpush1.bf16.msra.mxu0 0
      %229 = vmatprep.subr.bf16.mxu0 0
      %230 = vmatpush1.bf16.msra.mxu0 0
      %231 = vmatprep.subr.bf16.mxu0 0
      %232 = vmatpush1.bf16.msra.mxu0 0
      %233 = vmatprep.mubr.bf16.mxu0 0
      %234 = vmatmul.mubr.bf16.gmra.mrb[0].mxu0 %v190
      %v235 = vpop.f32.mrb[0].mxu0
      %v236 = vadd.f32 0.0, %v235
      %v237 = vpop.f32.mrb[0].mxu0
      %v238 = vpop.f32.mrb[0].mxu0
      %v239 = vadd.f32 0.0, %v238
      %v240 = vpop.f32.mrb[0].mxu0
      %241 = vmatprep.mubr.bf16.mxu0 0
      %242 = vmatmul.mubr.bf16.gmra.mrb[0].mxu0 %v193
      %v243 = vpop.f32.mrb[0].mxu0
      %v244 = vadd.f32 0.0, %v243
      %v245 = vpop.f32.mrb[0].mxu0
      %v246 = vpop.f32.mrb[0].mxu0
      %v247 = vadd.f32 0.0, %v246
      %v248 = vpop.f32.mrb[0].mxu0
      %249 = vmatprep.mubr.bf16.mxu0 0
      %250 = vmatmul.mubr.bf16.gmra.mrb[0].mxu0 %v196
      %v251 = vpop.f32.mrb[0].mxu0
      %v252 = vadd.f32 0.0, %v251
      %v253 = vpop.f32.mrb[0].mxu0
      %v254 = vpop.f32.mrb[0].mxu0
      %v255 = vadd.f32 0.0, %v254
      %v256 = vpop.f32.mrb[0].mxu0
      %257 = vmatprep.mubr.bf16.mxu0 0
      %258 = vmatmul.mubr.bf16.gmra.mrb[0].mxu0 %v199
      %v259 = vpop.f32.mrb[0].mxu0
      %v260 = vadd.f32 0.0, %v259
      %v261 = vpop.f32.mrb[0].mxu0
      %v262 = vpop.f32.mrb[0].mxu0
      %v263 = vadd.f32 0.0, %v262
      %v264 = vpop.f32.mrb[0].mxu0
      %265 = vdwg.mxu0
      %v267 = vcombine.high %v148, %v148
      %v269 = vunpack.c.l.s4 1966171168
      %v270 = vunpack.c.0.s8 %v269
      %v271 = vlaneseq
      %v272 = vshrl.u32 %v271, 7
      %v273 = vsub.s32 %v270, %v272
      %v274 = vrot.slane %v148, %v273
      %v276 = vunpack.c.l.s4 1966171168
      %v277 = vunpack.c.0.s8 %v276
      %v278 = vlaneseq
      %v279 = vshrl.u32 %v278, 7
      %v280 = vsub.s32 %v277, %v279
      %v281 = vrot.slane %v267, %v280
      %v282 = vcombine.high %v274, %v274
      %v283 = vcombine.high %v281, %v281
      %v285 = vunpack.c.l.s4 1966171168
      %v286 = vunpack.c.0.s8 %v285
      %v287 = vlaneseq
      %v288 = vshrl.u32 %v287, 7
      %v289 = vsub.s32 %v286, %v288
      %v290 = vrot.slane %v274, %v289
      %v292 = vunpack.c.l.s4 1966171168
      %v293 = vunpack.c.0.s8 %v292
      %v294 = vlaneseq
      %v295 = vshrl.u32 %v294, 7
      %v296 = vsub.s32 %v293, %v295
      %v297 = vrot.slane %v281, %v296
      %v299 = vunpack.c.l.s4 1966171168
      %v300 = vunpack.c.0.s8 %v299
      %v301 = vlaneseq
      %v302 = vshrl.u32 %v301, 7
      %v303 = vsub.s32 %v300, %v302
      %v304 = vrot.slane %v282, %v303
      %v306 = vunpack.c.l.s4 1966171168
      %v307 = vunpack.c.0.s8 %v306
      %v308 = vlaneseq
      %v309 = vshrl.u32 %v308, 7
      %v310 = vsub.s32 %v307, %v309
      %v311 = vrot.slane %v283, %v310
      %v312 = vcombine.high %v290, %v290
      %v313 = vcombine.high %v297, %v297
      %v314 = vcombine.high %v304, %v304
      %v315 = vcombine.high %v311, %v311
      %v316 = vlaneseq
      %v317 = vshrl.u32 %v316, 7
      %v318 = vsub.s32 0, %v317
      %v319 = vrot.slane %v290, %v318
      %v320 = vlaneseq
      %v321 = vshrl.u32 %v320, 7
      %v322 = vsub.s32 0, %v321
      %v323 = vrot.slane %v304, %v322
      %v324 = vlaneseq
      %v325 = vshrl.u32 %v324, 7
      %v326 = vsub.s32 0, %v325
      %v327 = vrot.slane %v312, %v326
      %v328 = vlaneseq
      %v329 = vshrl.u32 %v328, 7
      %v330 = vsub.s32 0, %v329
      %v331 = vrot.slane %v314, %v330
      %v332 = vlaneseq
      %v333 = vshrl.u32 %v332, 7
      %v334 = vsub.s32 0, %v333
      %v335 = vrot.slane %v297, %v334
      %v336 = vlaneseq
      %v337 = vshrl.u32 %v336, 7
      %v338 = vsub.s32 0, %v337
      %v339 = vrot.slane %v311, %v338
      %v340 = vlaneseq
      %v341 = vshrl.u32 %v340, 7
      %v342 = vsub.s32 0, %v341
      %v343 = vrot.slane %v313, %v342
      %v344 = vlaneseq
      %v345 = vshrl.u32 %v344, 7
      %v346 = vsub.s32 0, %v345
      %v347 = vrot.slane %v315, %v346
      %v356 = vadd.f32 %v236, %v319
      %v357 = vadd.f32 %v239, %v323
      %v358 = vadd.f32 %v244, %v327
      %v359 = vadd.f32 %v247, %v331
      %v360 = vadd.f32 %v252, %v335
      %v361 = vadd.f32 %v255, %v339
      %v362 = vadd.f32 %v260, %v343
      %v363 = vadd.f32 %v263, %v347
      %v364 = vtanh.pop %v356
      %v365 = vtanh.pop %v357
      %v366 = vtanh.pop %v358
      %v367 = vtanh.pop %v359
      %v368 = vtanh.pop %v360
      %v369 = vtanh.pop %v361
      %v370 = vtanh.pop %v362
      %v371 = vtanh.pop %v363
      %v372 = vld [vmem:[%s9] sm:$0x1]
      %v374 = vlaneseq
      %v375 = vshrl.u32 %v374, 7
      %v376 = vsub.s32 0, %v375
      %v377 = vrot.slane %v372, %v376
      %v379 = vmul.f32 %v364, %v377
      %v380 = vmul.f32 %v365, %v377
      %v381 = vmul.f32 %v366, %v377
      %v382 = vmul.f32 %v367, %v377
      %v383 = vmul.f32 %v368, %v377
      %v384 = vmul.f32 %v369, %v377
      %v385 = vmul.f32 %v370, %v377
      %v386 = vmul.f32 %v371, %v377
      %v387 = vsel %vm109, %v379, 0.0
      %388 = vadd.xlane.f32.xlu0 %v387
      %v389 = vpop.xlane.xlu0 %388
      %v390 = vsel %vm109, %v380, 0.0
      %391 = vadd.xlane.f32.xlu0 %v390
      %v392 = vpop.xlane.xlu0 %391
      %v393 = vsel %vm109, %v381, 0.0
      %394 = vadd.xlane.f32.xlu0 %v393
      %v395 = vpop.xlane.xlu0 %394
      %v396 = vsel %vm109, %v382, 0.0
      %397 = vadd.xlane.f32.xlu0 %v396
      %v398 = vpop.xlane.xlu0 %397
      %v399 = vsel %vm109, %v383, 0.0
      %400 = vadd.xlane.f32.xlu0 %v399
      %v401 = vpop.xlane.xlu0 %400
      %v402 = vsel %vm109, %v384, 0.0
      %403 = vadd.xlane.f32.xlu0 %v402
      %v404 = vpop.xlane.xlu0 %403
      %v405 = vsel %vm109, %v385, 0.0
      %406 = vadd.xlane.f32.xlu0 %v405
      %v407 = vpop.xlane.xlu0 %406
      %v408 = vsel %vm109, %v386, 0.0
      %409 = vadd.xlane.f32.xlu0 %v408
      %v410 = vpop.xlane.xlu0 %409
      %v411 = vld [vmem:[%s4] sm:$0xff]
      %vm412 = vcmp.eq.f32.partialorder %v411, 0.0
      %v421 = vlaneseq
      %v422 = vand.u32 %v421, 127
      %v423 = vlaneseq
      %v424 = vshrl.u32 %v423, 7
      %v425 = vsub.s32 %v422, %v424
      %v426 = vrot.slane %v389, %v425
      %v427 = vlaneseq
      %v428 = vshrl.u32 %v427, 7
      %v429 = vsub.s32 %v422, %v428
      %v430 = vrot.slane %v392, %v429
      %v431 = vlaneseq
      %v432 = vshrl.u32 %v431, 7
      %v433 = vsub.s32 %v422, %v432
      %v434 = vrot.slane %v395, %v433
      %v435 = vlaneseq
      %v436 = vshrl.u32 %v435, 7
      %v437 = vsub.s32 %v422, %v436
      %v438 = vrot.slane %v398, %v437
      %v439 = vlaneseq
      %v440 = vshrl.u32 %v439, 7
      %v441 = vsub.s32 %v422, %v440
      %v442 = vrot.slane %v401, %v441
      %v443 = vlaneseq
      %v444 = vshrl.u32 %v443, 7
      %v445 = vsub.s32 %v422, %v444
      %v446 = vrot.slane %v404, %v445
      %v447 = vlaneseq
      %v448 = vshrl.u32 %v447, 7
      %v449 = vsub.s32 %v422, %v448
      %v450 = vrot.slane %v407, %v449
      %v451 = vlaneseq
      %v452 = vshrl.u32 %v451, 7
      %v453 = vsub.s32 %v422, %v452
      %v454 = vrot.slane %v410, %v453
      %vm455 = vcmask 1041409
      %v456 = vsel %vm455, %v430, %v426
      %vm457 = vcmask 1042434
      %v458 = vsel %vm457, %v434, %v456
      %vm459 = vcmask 1043459
      %v460 = vsel %vm459, %v438, %v458
      %vm461 = vcmask 1044484
      %v462 = vsel %vm461, %v442, %v460
      %vm463 = vcmask 1045509
      %v464 = vsel %vm463, %v446, %v462
      %vm465 = vcmask 1046534
      %v466 = vsel %vm465, %v450, %v464
      %vm467 = vcmask 1047559
      %v468 = vsel %vm467, %v454, %v466
      %v470 = vsel %vm412, -1e+10, %v468
      %vm471 = vcmask 64512
      %v472 = vsel %vm471, %v470, -inf
      %473 = vmax.xlane.f32.xlu0 %v472
      %v474 = vpop.xlane.xlu0 %473
      %v475 = vsub.f32 %v470, %v474
      %v476 = vmul.f32 %v475, 1.442695
      %v477 = vpow.pop %v476
      %v478 = vsel %vm471, %v477, 0.0
      %479 = vadd.xlane.f32.xlu0 %v478
      %v480 = vpop.xlane.xlu0 %479
      %v481 = vrcp.pop %v480
      %v482 = vmul.f32 %v477, %v481
      %483 = vst.msk [vmem:[%s19] sm:$0xff] %vm471, %v482
      %v484 = vlaneseq
      %v485 = vshrl.u32 %v484, 7
      %v486 = vsub.s32 0, %v485
      %v487 = vrot.slane %v482, %v486
      %489 = vbcast.lane.b32.xlu0 %v487, 256
      %v490 = vpop.permute.xlu0 %489
      %v491 = vlaneseq
      %v492 = vshrl.u32 %v491, 7
      %v493 = vsub.s32 1, %v492
      %v494 = vrot.slane %v482, %v493
      %496 = vbcast.lane.b32.xlu0 %v494, 256
      %v497 = vpop.permute.xlu0 %496
      %v498 = vlaneseq
      %v499 = vshrl.u32 %v498, 7
      %v500 = vsub.s32 2, %v499
      %v501 = vrot.slane %v482, %v500
      %503 = vbcast.lane.b32.xlu0 %v501, 256
      %v504 = vpop.permute.xlu0 %503
      %v505 = vlaneseq
      %v506 = vshrl.u32 %v505, 7
      %v507 = vsub.s32 3, %v506
      %v508 = vrot.slane %v482, %v507
      %510 = vbcast.lane.b32.xlu0 %v508, 256
      %v511 = vpop.permute.xlu0 %510
      %v512 = vlaneseq
      %v513 = vshrl.u32 %v512, 7
      %v514 = vsub.s32 4, %v513
      %v515 = vrot.slane %v482, %v514
      %517 = vbcast.lane.b32.xlu0 %v515, 256
      %v518 = vpop.permute.xlu0 %517
      %v519 = vlaneseq
      %v520 = vshrl.u32 %v519, 7
      %v521 = vsub.s32 5, %v520
      %v522 = vrot.slane %v482, %v521
      %524 = vbcast.lane.b32.xlu0 %v522, 256
      %v525 = vpop.permute.xlu0 %524
      %v526 = vlaneseq
      %v527 = vshrl.u32 %v526, 7
      %v528 = vsub.s32 6, %v527
      %v529 = vrot.slane %v482, %v528
      %531 = vbcast.lane.b32.xlu0 %v529, 256
      %v532 = vpop.permute.xlu0 %531
      %v533 = vlaneseq
      %v534 = vshrl.u32 %v533, 7
      %v535 = vsub.s32 7, %v534
      %v536 = vrot.slane %v482, %v535
      %538 = vbcast.lane.b32.xlu0 %v536, 256
      %v539 = vpop.permute.xlu0 %538
      %v540 = vunpack.c.l.bf16 %v75
      %v541 = vunpack.c.l.bf16 %v76
      %v542 = vunpack.c.l.bf16 %v77
      %v543 = vunpack.c.l.bf16 %v78
      %v544 = vunpack.c.l.bf16 %v79
      %v545 = vunpack.c.l.bf16 %v80
      %v546 = vunpack.c.l.bf16 %v81
      %v547 = vunpack.c.l.bf16 %v82
      %v548 = vmul.f32 %v490, %v540
      %v549 = vmul.f32 %v497, %v541
      %v550 = vmul.f32 %v504, %v542
      %v551 = vmul.f32 %v511, %v543
      %v552 = vmul.f32 %v518, %v544
      %v553 = vmul.f32 %v525, %v545
      %v554 = vmul.f32 %v532, %v546
      %v555 = vmul.f32 %v539, %v547
      %v556 = vsel %vm109, %v548, 0.0
      %v557 = vrot.slane %v556, 4
      %v558 = vadd.f32 %v556, %v557
      %v559 = vrot.slane %v558, 2
      %v560 = vadd.f32 %v558, %v559
      %v561 = vrot.slane %v560, 1
      %v562 = vadd.f32 %v560, %v561
      %v563 = vsel %vm109, %v549, 0.0
      %v564 = vrot.slane %v563, 4
      %v565 = vadd.f32 %v563, %v564
      %v566 = vrot.slane %v565, 2
      %v567 = vadd.f32 %v565, %v566
      %v568 = vrot.slane %v567, 1
      %v569 = vadd.f32 %v567, %v568
      %v570 = vsel %vm109, %v550, 0.0
      %v571 = vrot.slane %v570, 4
      %v572 = vadd.f32 %v570, %v571
      %v573 = vrot.slane %v572, 2
      %v574 = vadd.f32 %v572, %v573
      %v575 = vrot.slane %v574, 1
      %v576 = vadd.f32 %v574, %v575
      %v577 = vsel %vm109, %v551, 0.0
      %v578 = vrot.slane %v577, 4
      %v579 = vadd.f32 %v577, %v578
      %v580 = vrot.slane %v579, 2
      %v581 = vadd.f32 %v579, %v580
      %v582 = vrot.slane %v581, 1
      %v583 = vadd.f32 %v581, %v582
      %v584 = vsel %vm109, %v552, 0.0
      %v585 = vrot.slane %v584, 4
      %v586 = vadd.f32 %v584, %v585
      %v587 = vrot.slane %v586, 2
      %v588 = vadd.f32 %v586, %v587
      %v589 = vrot.slane %v588, 1
      %v590 = vadd.f32 %v588, %v589
      %v591 = vsel %vm109, %v553, 0.0
      %v592 = vrot.slane %v591, 4
      %v593 = vadd.f32 %v591, %v592
      %v594 = vrot.slane %v593, 2
      %v595 = vadd.f32 %v593, %v594
      %v596 = vrot.slane %v595, 1
      %v597 = vadd.f32 %v595, %v596
      %v598 = vsel %vm109, %v554, 0.0
      %v599 = vrot.slane %v598, 4
      %v600 = vadd.f32 %v598, %v599
      %v601 = vrot.slane %v600, 2
      %v602 = vadd.f32 %v600, %v601
      %v603 = vrot.slane %v602, 1
      %v604 = vadd.f32 %v602, %v603
      %v605 = vsel %vm109, %v555, 0.0
      %v606 = vrot.slane %v605, 4
      %v607 = vadd.f32 %v605, %v606
      %v608 = vrot.slane %v607, 2
      %v609 = vadd.f32 %v607, %v608
      %v610 = vrot.slane %v609, 1
      %v611 = vadd.f32 %v609, %v610
      %s612 = sld [smem:[#allocation3]]
      %s613 = scalar_lea.vmem %s5, %s612
      %v614 = vld [vmem:[%s613] sm:$0x1]
      %s615 = sld [smem:[#allocation3 + $0x1]]
      %s616 = scalar_lea.vmem %s5, %s615
      %v617 = vld [vmem:[%s616] sm:$0x1]
      %v619 = vrot.slane %v617, 7
      %vm621 = vcmask 1040384
      %v622 = vsel %vm621, %v614, %v619
      %vm623 = vcmask 1041408
      %v624 = vsel %vm623, %v622, 0.0
      %v633 = vsel %vm455, %v569, %v562
      %v634 = vsel %vm457, %v576, %v633
      %v635 = vsel %vm459, %v583, %v634
      %v636 = vsel %vm461, %v590, %v635
      %v637 = vsel %vm463, %v597, %v636
      %v638 = vsel %vm465, %v604, %v637
      %v639 = vsel %vm467, %v611, %v638
      %640 = vrot.lane.b32.xlu0 %v639, 32
      %v641 = vpop.permute.xlu0 %640
      %v643 = vsel %vm109, %v624, %v641
      %v644 = vld [vmem:[%s1] sm:$0xff]
      %v645 = vld [vmem:[%s2] sm:$0xff]
      %647 = vrot.lane.b32.xlu0 %v644, 64
      %v648 = vpop.permute.xlu0 %647
      %vm650 = vcmask 523264
      %v651 = vsel %vm650, %v643, %v648
      %v652 = vpack.c.bf16 %v651, %v651
      %v653 = vld [vmem:[%s11] sm:$0x1]
      %v654 = vld [vmem:[%s10] sm:$0xf]
      %v655 = vld [vmem:[%s10 + $0x4] sm:$0xf]
      %v656 = vld [vmem:[%s10 + $0x8] sm:$0xf]
      %v657 = vld [vmem:[%s10 + $0xc] sm:$0xf]
      %v658 = vld [vmem:[%s10 + $0x10] sm:$0xf]
      %v659 = vld [vmem:[%s10 + $0x14] sm:$0xf]
      %v660 = vld [vmem:[%s10 + $0x18] sm:$0xf]
      %v661 = vld [vmem:[%s10 + $0x1c] sm:$0xf]
      %v662 = vld [vmem:[%s10 + $0x20] sm:$0xf]
      %v663 = vld [vmem:[%s10 + $0x24] sm:$0xf]
      %v664 = vld [vmem:[%s10 + $0x28] sm:$0xf]
      %v665 = vld [vmem:[%s10 + $0x2c] sm:$0xf]
      %v678 = vunpack.c.l.b16 %v654
      %v679 = vunpack.c.l.b16 %v655
      %v680 = vunpack.c.l.b16 %v656
      %v681 = vunpack.c.l.b16 %v657
      %v682 = vunpack.c.l.b16 %v658
      %v683 = vunpack.c.l.b16 %v659
      %v684 = vunpack.c.l.b16 %v660
      %v685 = vunpack.c.l.b16 %v661
      %v686 = vunpack.c.l.b16 %v662
      %v687 = vunpack.c.l.b16 %v663
      %v688 = vunpack.c.l.b16 %v664
      %v689 = vunpack.c.l.b16 %v665
      %v690 = vpack.c.b16 %v679, %v678
      %v691 = vpack.c.b16 %v681, %v680
      %v692 = vpack.c.b16 %v683, %v682
      %v693 = vpack.c.b16 %v685, %v684
      %v694 = vpack.c.b16 %v687, %v686
      %v695 = vpack.c.b16 %v689, %v688
      %vm702 = vcmask 785408
      %v704 = vsel %vm702, %v652, 0
      %706 = vmatprep.subr.bf16.mxu0 0
      %707 = vmatpush1.bf16.msra.mxu0 %v690
      %708 = vmatprep.subr.bf16.mxu0 0
      %709 = vmatpush1.bf16.msra.mxu0 %v691
      %710 = vmatprep.subr.bf16.mxu0 0
      %711 = vmatpush1.bf16.msra.mxu0 %v692
      %712 = vmatprep.subr.bf16.mxu0 0
      %713 = vmatpush1.bf16.msra.mxu0 %v693
      %714 = vmatprep.subr.bf16.mxu0 0
      %715 = vmatpush1.bf16.msra.mxu0 %v694
      %716 = vmatprep.subr.bf16.mxu0 0
      %717 = vmatpush1.bf16.msra.mxu0 %v695
      %718 = vmatprep.subr.bf16.mxu0 0
      %719 = vmatpush1.bf16.msra.mxu0 0
      %720 = vmatprep.subr.bf16.mxu0 0
      %721 = vmatpush1.bf16.msra.mxu0 0
      %722 = vmatprep.subr.bf16.mxu0 0
      %723 = vmatpush1.bf16.msra.mxu0 0
      %724 = vmatprep.subr.bf16.mxu0 0
      %725 = vmatpush1.bf16.msra.mxu0 0
      %726 = vmatprep.subr.bf16.mxu0 0
      %727 = vmatpush1.bf16.msra.mxu0 0
      %728 = vmatprep.subr.bf16.mxu0 0
      %729 = vmatpush1.bf16.msra.mxu0 0
      %730 = vmatprep.subr.bf16.mxu0 0
      %731 = vmatpush1.bf16.msra.mxu0 0
      %732 = vmatprep.subr.bf16.mxu0 0
      %733 = vmatpush1.bf16.msra.mxu0 0
      %734 = vmatprep.subr.bf16.mxu0 0
      %735 = vmatpush1.bf16.msra.mxu0 0
      %736 = vmatprep.subr.bf16.mxu0 0
      %737 = vmatpush1.bf16.msra.mxu0 0
      %738 = vmatprep.mubr.bf16.mxu0 0
      %739 = vmatmul.mubr.bf16.gmra.mrb[0].mxu0 %v704
      %v740 = vpop.f32.mrb[0].mxu0
      %v741 = vadd.f32 0.0, %v740
      %v742 = vpop.f32.mrb[0].mxu0
      %v743 = vpop.f32.mrb[0].mxu0
      %v744 = vpop.f32.mrb[0].mxu0
      %745 = vdwg.mxu0
      %v747 = vlaneseq
      %v748 = vshrl.u32 %v747, 7
      %v749 = vsub.s32 0, %v748
      %v750 = vrot.slane %v653, %v749
      %v752 = vadd.f32 %v750, %v741
      %v753 = vxor.u32 %v752, 2147483648
      %v754 = vmul.f32 %v753, 1.442695
      %v755 = vpow.pop %v754
      %v756 = vadd.f32 %v755, 1.0
      %v757 = vrcp.pop %v756
      %v758 = vmul.f32 1.0, %v757
      %v759 = vtanh.pop %v752
      %761 = vrot.lane.b32.xlu0 %v645, 32
      %v762 = vpop.permute.xlu0 %761
      %v764 = vmul.f32 %v758, %v762
      %766 = vrot.lane.b32.xlu0 %v759, 64
      %v767 = vpop.permute.xlu0 %766
      %v769 = vmul.f32 %v758, %v767
      %771 = vrot.lane.b32.xlu0 %v769, 32
      %v772 = vpop.permute.xlu0 %771
      %v774 = vadd.f32 %v764, %v772
      %v775 = vtanh.pop %v774
      %777 = vrot.lane.b32.xlu0 %v775, 64
      %v778 = vpop.permute.xlu0 %777
      %v780 = vmul.f32 %v758, %v778
      %782 = vrot.lane.b32.xlu0 %v780, 32
      %v783 = vpop.permute.xlu0 %782
      %785 = vst.msk [vmem:[%s17] sm:$0xff] %vm109, %v783
      %787 = vrot.lane.b32.xlu0 %v774, 96
      %v788 = vpop.permute.xlu0 %787
      %790 = vst.msk [vmem:[%s18] sm:$0xff] %vm109, %v788
      %v791 = vld [vmem:[%s83] sm:$0xff]
      %s792 = scalar_lea.vmem %s2, 8
      %v793 = vld [vmem:[%s792] sm:$0xff]
      %795 = vrot.lane.b32.xlu0 %v791, 32
      %v796 = vpop.permute.xlu0 %795
      %v798 = vsel %vm109, %v783, %v796
      %v799 = vpack.c.bf16 %v798, %v798
      %v800 = vld [vmem:[%s13] sm:$0x1]
      %v801 = vld [vmem:[%s12] sm:$0xf]
      %v802 = vld [vmem:[%s12 + $0x4] sm:$0xf]
      %v803 = vld [vmem:[%s12 + $0x8] sm:$0xf]
      %v804 = vld [vmem:[%s12 + $0xc] sm:$0xf]
      %v805 = vld [vmem:[%s12 + $0x10] sm:$0xf]
      %v806 = vld [vmem:[%s12 + $0x14] sm:$0xf]
      %v807 = vld [vmem:[%s12 + $0x18] sm:$0xf]
      %v808 = vld [vmem:[%s12 + $0x1c] sm:$0xf]
      %v817 = vunpack.c.l.b16 %v801
      %v818 = vunpack.c.l.b16 %v802
      %v819 = vunpack.c.l.b16 %v803
      %v820 = vunpack.c.l.b16 %v804
      %v821 = vunpack.c.l.b16 %v805
      %v822 = vunpack.c.l.b16 %v806
      %v823 = vunpack.c.l.b16 %v807
      %v824 = vunpack.c.l.b16 %v808
      %v825 = vpack.c.b16 %v818, %v817
      %v826 = vpack.c.b16 %v820, %v819
      %v827 = vpack.c.b16 %v822, %v821
      %v828 = vpack.c.b16 %v824, %v823
      %v834 = vsel %vm650, %v799, 0
      %836 = vmatprep.subr.bf16.mxu0 0
      %837 = vmatpush1.bf16.msra.mxu0 %v825
      %838 = vmatprep.subr.bf16.mxu0 0
      %839 = vmatpush1.bf16.msra.mxu0 %v826
      %840 = vmatprep.subr.bf16.mxu0 0
      %841 = vmatpush1.bf16.msra.mxu0 %v827
      %842 = vmatprep.subr.bf16.mxu0 0
      %843 = vmatpush1.bf16.msra.mxu0 %v828
      %844 = vmatprep.subr.bf16.mxu0 0
      %845 = vmatpush1.bf16.msra.mxu0 0
      %846 = vmatprep.subr.bf16.mxu0 0
      %847 = vmatpush1.bf16.msra.mxu0 0
      %848 = vmatprep.subr.bf16.mxu0 0
      %849 = vmatpush1.bf16.msra.mxu0 0
      %850 = vmatprep.subr.bf16.mxu0 0
      %851 = vmatpush1.bf16.msra.mxu0 0
      %852 = vmatprep.subr.bf16.mxu0 0
      %853 = vmatpush1.bf16.msra.mxu0 0
      %854 = vmatprep.subr.bf16.mxu0 0
      %855 = vmatpush1.bf16.msra.mxu0 0
      %856 = vmatprep.subr.bf16.mxu0 0
      %857 = vmatpush1.bf16.msra.mxu0 0
      %858 = vmatprep.subr.bf16.mxu0 0
      %859 = vmatpush1.bf16.msra.mxu0 0
      %860 = vmatprep.subr.bf16.mxu0 0
      %861 = vmatpush1.bf16.msra.mxu0 0
      %862 = vmatprep.subr.bf16.mxu0 0
      %863 = vmatpush1.bf16.msra.mxu0 0
      %864 = vmatprep.subr.bf16.mxu0 0
      %865 = vmatpush1.bf16.msra.mxu0 0
      %866 = vmatprep.subr.bf16.mxu0 0
      %867 = vmatpush1.bf16.msra.mxu0 0
      %868 = vmatprep.mubr.bf16.mxu0 0
      %869 = vmatmul.mubr.bf16.gmra.mrb[0].mxu0 %v834
      %v870 = vpop.f32.mrb[0].mxu0
      %v871 = vadd.f32 0.0, %v870
      %v872 = vpop.f32.mrb[0].mxu0
      %v873 = vpop.f32.mrb[0].mxu0
      %v874 = vpop.f32.mrb[0].mxu0
      %875 = vdwg.mxu0
      %v877 = vlaneseq
      %v878 = vshrl.u32 %v877, 7
      %v879 = vsub.s32 0, %v878
      %v880 = vrot.slane %v800, %v879
      %v882 = vadd.f32 %v880, %v871
      %v883 = vxor.u32 %v882, 2147483648
      %v884 = vmul.f32 %v883, 1.442695
      %v885 = vpow.pop %v884
      %v886 = vadd.f32 %v885, 1.0
      %v887 = vrcp.pop %v886
      %v888 = vmul.f32 1.0, %v887
      %v889 = vtanh.pop %v882
      %891 = vrot.lane.b32.xlu0 %v793, 32
      %v892 = vpop.permute.xlu0 %891
      %v894 = vmul.f32 %v888, %v892
      %896 = vrot.lane.b32.xlu0 %v889, 64
      %v897 = vpop.permute.xlu0 %896
      %v899 = vmul.f32 %v888, %v897
      %901 = vrot.lane.b32.xlu0 %v899, 32
      %v902 = vpop.permute.xlu0 %901
      %v904 = vadd.f32 %v894, %v902
      %v905 = vtanh.pop %v904
      %907 = vrot.lane.b32.xlu0 %v905, 64
      %v908 = vpop.permute.xlu0 %907
      %v910 = vmul.f32 %v888, %v908
      %912 = vrot.lane.b32.xlu0 %v910, 32
      %v913 = vpop.permute.xlu0 %912
      %s915 = scalar_lea.vmem %s17, 8
      %916 = vst.msk [vmem:[%s915] sm:$0xff] %vm109, %v913
      %918 = vrot.lane.b32.xlu0 %v904, 96
      %v919 = vpop.permute.xlu0 %918
      %s921 = scalar_lea.vmem %s18, 8
      %922 = vst.msk [vmem:[%s921] sm:$0xff] %vm109, %v919
      %924 = vrot.lane.b32.xlu0 %v624, 64
      %v925 = vpop.permute.xlu0 %924
      %v927 = vsel %vm109, %v913, %v641
      %v928 = vsel %vm650, %v927, %v925
      %v929 = vpack.c.bf16 %v928, %v928
      %vm930 = vcmask 781312
      %931 = vst.msk [vmem:[#allocation2] sm:$0xf] %vm930, %v929
    $region73: #{decoder_forward.1} parent=1 // pred_fallthru
      _
    %v932 = vld [vmem:[#allocation2] sm:$0xf]
    %v933 = vld [vmem:[%s14] sm:$0xf]
    %v934 = vld [vmem:[%s14 + $0x4] sm:$0xf]
    %v935 = vld [vmem:[%s14 + $0x8] sm:$0xf]
    %v936 = vld [vmem:[%s14 + $0xc] sm:$0xf]
    %v937 = vld [vmem:[%s14 + $0x10] sm:$0xf]
    %v938 = vld [vmem:[%s14 + $0x14] sm:$0xf]
    %v939 = vld [vmem:[%s14 + $0x18] sm:$0xf]
    %v940 = vld [vmem:[%s14 + $0x1c] sm:$0xf]
    %v941 = vld [vmem:[%s14 + $0x20] sm:$0xf]
    %v942 = vld [vmem:[%s14 + $0x24] sm:$0xf]
    %v943 = vld [vmem:[%s14 + $0x28] sm:$0xf]
    %v944 = vld [vmem:[%s14 + $0x2c] sm:$0xf]
    %v945 = vld [vmem:[%s15] sm:$0x1]
    %v947 = vlaneseq
    %v948 = vshrl.u32 %v947, 7
    %v949 = vsub.s32 0, %v948
    %v950 = vrot.slane %v945, %v949
    %v964 = vunpack.c.l.b16 %v933
    %v965 = vunpack.c.l.b16 %v934
    %v966 = vunpack.c.l.b16 %v935
    %v967 = vunpack.c.l.b16 %v936
    %v968 = vunpack.c.l.b16 %v937
    %v969 = vunpack.c.l.b16 %v938
    %v970 = vunpack.c.l.b16 %v939
    %v971 = vunpack.c.l.b16 %v940
    %v972 = vunpack.c.l.b16 %v941
    %v973 = vunpack.c.l.b16 %v942
    %v974 = vunpack.c.l.b16 %v943
    %v975 = vunpack.c.l.b16 %v944
    %v976 = vpack.c.b16 %v965, %v964
    %v977 = vpack.c.b16 %v967, %v966
    %v978 = vpack.c.b16 %v969, %v968
    %v979 = vpack.c.b16 %v971, %v970
    %v980 = vpack.c.b16 %v973, %v972
    %v981 = vpack.c.b16 %v975, %v974
    %vm988 = vcmask 785408
    %v990 = vsel %vm988, %v932, 0
    %992 = vmatprep.subr.bf16.mxu0 0
    %993 = vmatpush1.bf16.msra.mxu0 %v976
    %994 = vmatprep.subr.bf16.mxu0 0
    %995 = vmatpush1.bf16.msra.mxu0 %v977
    %996 = vmatprep.subr.bf16.mxu0 0
    %997 = vmatpush1.bf16.msra.mxu0 %v978
    %998 = vmatprep.subr.bf16.mxu0 0
    %999 = vmatpush1.bf16.msra.mxu0 %v979
    %1000 = vmatprep.subr.bf16.mxu0 0
    %1001 = vmatpush1.bf16.msra.mxu0 %v980
    %1002 = vmatprep.subr.bf16.mxu0 0
    %1003 = vmatpush1.bf16.msra.mxu0 %v981
    %1004 = vmatprep.subr.bf16.mxu0 0
    %1005 = vmatpush1.bf16.msra.mxu0 0
    %1006 = vmatprep.subr.bf16.mxu0 0
    %1007 = vmatpush1.bf16.msra.mxu0 0
    %1008 = vmatprep.subr.bf16.mxu0 0
    %1009 = vmatpush1.bf16.msra.mxu0 0
    %1010 = vmatprep.subr.bf16.mxu0 0
    %1011 = vmatpush1.bf16.msra.mxu0 0
    %1012 = vmatprep.subr.bf16.mxu0 0
    %1013 = vmatpush1.bf16.msra.mxu0 0
    %1014 = vmatprep.subr.bf16.mxu0 0
    %1015 = vmatpush1.bf16.msra.mxu0 0
    %1016 = vmatprep.subr.bf16.mxu0 0
    %1017 = vmatpush1.bf16.msra.mxu0 0
    %1018 = vmatprep.subr.bf16.mxu0 0
    %1019 = vmatpush1.bf16.msra.mxu0 0
    %1020 = vmatprep.subr.bf16.mxu0 0
    %1021 = vmatpush1.bf16.msra.mxu0 0
    %1022 = vmatprep.subr.bf16.mxu0 0
    %1023 = vmatpush1.bf16.msra.mxu0 0
    %1024 = vmatprep.mubr.bf16.mxu0 0
    %1025 = vmatmul.mubr.bf16.gmra.mrb[0].mxu0 %v990
    %v1026 = vpop.f32.mrb[0].mxu0
    %v1027 = vadd.f32 %v950, %v1026
    %v1028 = vpop.f32.mrb[0].mxu0
    %v1029 = vpop.f32.mrb[0].mxu0
    %v1030 = vpop.f32.mrb[0].mxu0
    %1031 = vdwg.mxu0
    %1032 = vst [vmem:[%s16] sm:$0xff] %v1027
    // Predicated region
    $region74: #{decoder_forward.1} parent=1 // pred_check
      _
    $region75: #{decoder_forward.1} parent=1 // pred_check_branch
      %1034 = sbr.rel (0) target = $region77
    $region76: #{decoder_forward.1} parent=1 // pred_region
      _
    $region77: #{decoder_forward.1} parent=1 // pred_fallthru
      _
    // Predicated region
    $region78: #{decoder_forward.1} parent=1 // pred_check
      _
    $region79: #{decoder_forward.1} parent=1 // pred_check_branch
      %1036 = sbr.rel (0) target = $region81
    $region80: #{decoder_forward.1} parent=1 // pred_region
      _
    $region81: #{decoder_forward.1} parent=1 // pred_fallthru
      _
    // Predicated region
    $region82: #{decoder_forward.1} parent=1 // pred_check
      _
    $region83: #{decoder_forward.1} parent=1 // pred_check_branch
      %1038 = sbr.rel (0) target = $region85
    $region84: #{decoder_forward.1} parent=1 // pred_region
      _
    $region85: #{decoder_forward.1} parent=1 // pred_fallthru
      _
    // Predicated region
    $region86: #{decoder_forward.1} parent=1 // pred_check
      _
    $region87: #{decoder_forward.1} parent=1 // pred_check_branch
      %1040 = sbr.rel (0) target = $region89
    $region88: #{decoder_forward.1} parent=1 // pred_region
      _
    $region89: #{decoder_forward.1} parent=1 // pred_fallthru
      _
    // Predicated region
    $region90: #{decoder_forward.1} parent=1 // pred_check
      _
    $region91: #{decoder_forward.1} parent=1 // pred_check_branch
      %1042 = sbr.rel (0) target = $region93
    $region92: #{decoder_forward.1} parent=1 // pred_region
      _
    $region93: #{decoder_forward.1} parent=1 // pred_fallthru
      _
    // Predicated region
    $region94: #{decoder_forward.1} parent=1 // pred_check
      _
    $region95: #{decoder_forward.1} parent=1 // pred_check_branch
      %1044 = sbr.rel (0) target = $region97
    $region96: #{decoder_forward.1} parent=1 // pred_region
      _
    $region97: #{decoder_forward.1} parent=1 // pred_fallthru
      _
    // Predicated region
    $region98: #{decoder_forward.1} parent=1 // pred_check
      _
    $region99: #{decoder_forward.1} parent=1 // pred_check_branch
      %1046 = sbr.rel (0) target = $region101
    $region100: #{decoder_forward.1} parent=1 // pred_region
      _
    $region101: #{decoder_forward.1} parent=1 // pred_fallthru
      _
    // Predicated region
    $region102: #{decoder_forward.1} parent=1 // pred_check
      _
    $region103: #{decoder_forward.1} parent=1 // pred_check_branch
      %1048 = sbr.rel (0) target = $region105
    $region104: #{decoder_forward.1} parent=1 // pred_region
      _
    $region105: #{decoder_forward.1} parent=1 // pred_fallthru
      _
    %1049 = vsyncpa [#allocation4], 1

</llo_original>
